<compile_context>
chip_gen: v5e
topology: v5e:2x2
jax: 0.10.0
libtpu: 0.0.40
codegen_flags: <defaults>
</compile_context>

<pallas_src>
import functools

import jax
import jax.numpy as jnp
from jax.experimental import pallas as pl
from jax.experimental.pallas import tpu as pltpu

_LANE = 128


def _round_up(x, m):
    return (x + m - 1) // m * m


def _fp_kernel(xyz1_ref, xyz2t_ref, p1_ref, p2_ref,
               w1a_ref, w1b_ref, s1_ref, t1_ref,
               w2_ref, s2_ref, t2_ref,
               out_ref, *, mxu_dtype, approx_recip):
    xyz1 = xyz1_ref[0]        # (TN1, 3)   f32
    x2t = xyz2t_ref[0]        # (3, N2p)   f32, N2 on the lane axis
    p1 = p1_ref[0]            # (TN1, C1p) mxu_dtype (pre-cast in wrapper)
    p2 = p2_ref[0]            # (N2p, C2p) mxu_dtype (pre-cast in wrapper)

    tn1 = xyz1.shape[0]
    n2 = x2t.shape[1]

    # ---- squared pairwise distances: 3 VPU broadcast passes (no MXU K=3
    # ---- matmul, no full (TN1,N2) sqrt) --------------------------------------
    d2 = None
    for k in range(3):
        diff = xyz1[:, k:k + 1] - x2t[k:k + 1, :]        # (TN1,1)-(1,N2)->(TN1,N2)
        sq = diff * diff
        d2 = sq if d2 is None else d2 + sq

    # ---- fused 3-NN, ONE XLU reduction per pass ------------------------------
    # d2 >= 0, so the i32 ordering of its bit pattern equals the f32 ordering.
    # Pack the lane index into the low mantissa bits: a single int-min yields
    # both the (slightly floored) min distance and a unique arg-min selector.
    nbits = max(1, (n2 - 1).bit_length())
    clear = jnp.int32(~((1 << nbits) - 1))
    lane = jax.lax.broadcasted_iota(jnp.int32, (tn1, n2), dimension=1)
    packed = (pltpu.bitcast(d2, jnp.int32) & clear) | lane

    # Unnormalized inverse-distance weights accumulated in-place, directly in
    # the MXU dtype (one less full-width f32 live array + cast pass).
    wacc = jnp.zeros((tn1, n2), mxu_dtype)
    wsum = jnp.zeros((tn1, 1), jnp.float32)
    for _ in range(3):
        pmin = jnp.min(packed, axis=-1, keepdims=True)             # (TN1,1) i32
        d2min = pltpu.bitcast(pmin & clear, jnp.float32)           # (TN1,1) f32
        w = 1.0 / (jnp.sqrt(d2min) + 1e-8)                         # (TN1,1) f32
        sel = packed == pmin                                       # exactly 1/row
        wacc = jnp.where(sel, w.astype(mxu_dtype), wacc)
        wsum = wsum + w
        packed = jnp.where(sel, jnp.int32(0x7FFFFFFF), packed)

    if approx_recip:
        inv_wsum = pl.reciprocal(wsum, approx=True)                # (TN1,1)
    else:
        inv_wsum = 1.0 / wsum                                      # exact path

    # ---- interpolation: sparse one-hot weight matmul on the MXU, normalize
    # ---- the skinny (TN1,C2) result instead of the (TN1,N2) matrix ----------
    # TODO(synk): for very large N2 (>~4K) a 3-row gather of p2 beats the dense
    # one-hot matmul (MXU cost scales with N2); kept dense for moderate N2.
    interp = jnp.dot(wacc, p2, preferred_element_type=jnp.float32) * inv_wsum

    # ---- MLP layer 0: Conv1x1 over concat([interp, points1]) + BN + ReLU ----
    # concat([interp, p1]) @ W0^T == interp @ W0a + p1 @ W0b  (weights pre-split)
    h = (jnp.dot(interp.astype(mxu_dtype), w1a_ref[...],
                 preferred_element_type=jnp.float32)
         + jnp.dot(p1, w1b_ref[...], preferred_element_type=jnp.float32))
    h = jnp.maximum(h * s1_ref[...] + t1_ref[...], 0.0)

    # ---- MLP layer 1: Conv1x1 + BN + ReLU ------------------------------------
    h = jnp.dot(h.astype(mxu_dtype), w2_ref[...],
                preferred_element_type=jnp.float32)
    h = jnp.maximum(h * s2_ref[...] + t2_ref[...], 0.0)

    out_ref[0] = h.astype(out_ref.dtype)


def pointnet_fp_forward(xyz1, xyz2, points1, points2, params, *,
                        tile_n1=None, mxu_dtype=jnp.bfloat16,
                        out_dtype=None, vmem_limit_bytes=None,
                        single_buffer_invariants=True):
    B, N1, _ = xyz1.shape
    _, N2, _ = xyz2.shape
    C1 = points1.shape[-1]
    C2 = points2.shape[-1]
    # TODO(synk): the PyTorch module has an N2 == 1 broadcast special case;
    # the 3-NN kernel requires N2 >= 3.
    assert N2 >= 3, "kernel requires N2 >= 3"
    if out_dtype is None:
        out_dtype = points1.dtype

    w1a, w1b, s1, t1, w2, s2, t2 = params
    H0, H1 = w1a.shape[-1], w2.shape[-1]
    C1p, C2p = _round_up(C1, _LANE), _round_up(C2, _LANE)
    H0p, H1p = _round_up(H0, _LANE), _round_up(H1, _LANE)
    N2p = _round_up(N2, _LANE)

    # Lane-dense zero padding of channels (padded channels stay exactly zero
    # through the folded BN and are sliced off at the end) and of N2 (sentinel
    # far-away coordinates can never win the 3-NN min).
    w1a_p = jnp.pad(w1a, ((0, C2p - C2), (0, H0p - H0))).astype(mxu_dtype)
    w1b_p = jnp.pad(w1b, ((0, C1p - C1), (0, H0p - H0))).astype(mxu_dtype)
    w2_p = jnp.pad(w2, ((0, H0p - H0), (0, H1p - H1))).astype(mxu_dtype)
    s1_p = jnp.pad(s1, ((0, 0), (0, H0p - H0)))
    t1_p = jnp.pad(t1, ((0, 0), (0, H0p - H0)))
    s2_p = jnp.pad(s2, ((0, 0), (0, H1p - H1)))
    t2_p = jnp.pad(t2, ((0, 0), (0, H1p - H1)))

    xyz2_p = jnp.pad(xyz2, ((0, 0), (0, N2p - N2), (0, 0)), constant_values=1e9)
    xyz2t = jnp.transpose(xyz2_p, (0, 2, 1))                       # (B, 3, N2p)
    # Pre-cast features to the MXU dtype: halves their HBM DMA / VMEM and
    # removes full-width in-kernel cast passes (xyz distance math stays f32).
    points1_p = jnp.pad(points1, ((0, 0), (0, 0), (0, C1p - C1))).astype(mxu_dtype)
    points2_p = jnp.pad(points2, ((0, 0), (0, N2p - N2),
                                  (0, C2p - C2))).astype(mxu_dtype)

    # Chip-aware VMEM budget (v7x: 64 MiB physical, v5e/v6e: 128 MiB).
    if vmem_limit_bytes is None:
        try:
            cap = pltpu.get_tpu_info().vmem_capacity_bytes
        except Exception:
            cap = 64 * 1024 * 1024
        vmem_limit_bytes = min((cap * 3) // 4, 112 * 1024 * 1024)
    # N2-aware tile size: the (TN1, N2p) selection intermediates dominate VMEM.
    if tile_n1 is None:
        big_vmem = vmem_limit_bytes >= 72 * 1024 * 1024
        if N2p <= 1024:
            tile_n1 = 1024 if big_vmem else 512
        elif N2p <= 2048:
            tile_n1 = 512 if big_vmem else 256
        elif N2p <= 4096:
            tile_n1 = 256 if big_vmem else 128
        else:
            tile_n1 = 128
    tn1 = min(N1, tile_n1)
    if B == 1:
        # Keep >= 2 parallel grid steps so both TensorCores of a 2-TC chip
        # (v7x megacore) get work.
        half = _round_up((N1 + 1) // 2, 8)
        if 8 <= half < N1:
            tn1 = min(tn1, half)

    grid = (B, pl.cdiv(N1, tn1))

    def _call(single_buf):
        def inv_spec(shape, imap):
            # Grid-invariant / per-batch-only blocks: single-buffer to halve
            # their VMEM footprint (they only re-DMA when b changes).
            if single_buf:
                return pl.BlockSpec(shape, imap, pipeline_mode=pl.Buffered(1))
            return pl.BlockSpec(shape, imap)

        in_specs = [
            pl.BlockSpec((1, tn1, 3), lambda b, i: (b, i, 0)),       # xyz1 tile
            inv_spec((1, 3, N2p), lambda b, i: (b, 0, 0)),           # xyz2^T
            pl.BlockSpec((1, tn1, C1p), lambda b, i: (b, i, 0)),     # points1 tile
            inv_spec((1, N2p, C2p), lambda b, i: (b, 0, 0)),         # points2
            inv_spec((C2p, H0p), lambda b, i: (0, 0)),               # w1a
            inv_spec((C1p, H0p), lambda b, i: (0, 0)),               # w1b
            inv_spec((1, H0p), lambda b, i: (0, 0)),                 # bn0 scale
            inv_spec((1, H0p), lambda b, i: (0, 0)),                 # bn0 shift
            inv_spec((H0p, H1p), lambda b, i: (0, 0)),               # w2
            inv_spec((1, H1p), lambda b, i: (0, 0)),                 # bn1 scale
            inv_spec((1, H1p), lambda b, i: (0, 0)),                 # bn1 shift
        ]
        out_specs = pl.BlockSpec((1, tn1, H1p), lambda b, i: (b, i, 0))
        return pl.pallas_call(
            functools.partial(_fp_kernel, mxu_dtype=mxu_dtype,
                              approx_recip=(mxu_dtype != jnp.float32)),
            out_shape=jax.ShapeDtypeStruct((B, N1, H1p), out_dtype),
            grid_spec=pltpu.PrefetchScalarGridSpec(
                num_scalar_prefetch=0,
                grid=grid,
                in_specs=in_specs,
                out_specs=out_specs,
            ),
            compiler_params=pltpu.CompilerParams(
                dimension_semantics=("parallel", "parallel"),
                vmem_limit_bytes=int(vmem_limit_bytes),
            ),
        )(xyz1, xyz2t, points1_p, points2_p,
          w1a_p, w1b_p, s1_p, t1_p, w2_p, s2_p, t2_p)

    if single_buffer_invariants:
        try:
            out = _call(True)
        except Exception:
            out = _call(False)   # fallback: default double-buffered specs
    else:
        out = _call(False)

    if H1p != H1:
        out = out[..., :H1]
    return out


def make_params(key, C1, C2, mlp, eps=1e-5):
    """Deterministic Conv2d(1x1, bias=False) weights + eval-mode BN folded to scale/shift."""
    assert len(mlp) == 2, "kernel is specialized to a 2-layer MLP"
    in_ch = C1 + C2
    ws, scales, shifts = [], [], []
    for out_ch in mlp:
        key, k_w, k_g, k_b, k_m, k_v = jax.random.split(key, 6)
        w = jax.random.normal(k_w, (out_ch, in_ch), jnp.float32) * 0.1  # Conv2d (O,I,1,1) squeezed
        gamma = jax.random.uniform(k_g, (out_ch,), jnp.float32, 0.5, 1.5)
        beta = jax.random.normal(k_b, (out_ch,), jnp.float32) * 0.1
        mean = jax.random.normal(k_m, (out_ch,), jnp.float32) * 0.1
        var = jax.random.uniform(k_v, (out_ch,), jnp.float32, 0.5, 1.5)
        scale = gamma / jnp.sqrt(var + eps)
        shift = beta - mean * scale
        ws.append(w)
        scales.append(scale)
        shifts.append(shift)
        in_ch = out_ch
    # split layer-0 weight to match concat([interp(C2), points1(C1)], dim=-1)
    w1a = ws[0][:, :C2].T          # (C2, H0)
    w1b = ws[0][:, C2:].T          # (C1, H0)
    w2 = ws[1].T                   # (H0, H1)
    return (w1a, w1b,
            scales[0][None, :], shifts[0][None, :],
            w2,
            scales[1][None, :], shifts[1][None, :])


def ref_forward(xyz1, xyz2, points1, points2, params):
    """Pure-JAX reference mirroring the PyTorch forward (eval-mode BN)."""
    w1a, w1b, s1, t1, w2, s2, t2 = params
    d = (jnp.sum(xyz1 ** 2, -1)[:, :, None]
         + jnp.sum(xyz2 ** 2, -1)[:, None, :]
         - 2.0 * jnp.einsum('bnc,bmc->bnm', xyz1, xyz2,
                            preferred_element_type=jnp.float32))
    d = jnp.where(d < 0, 1e-7, d)
    d = jnp.sqrt(d)
    idx = jnp.argsort(d, axis=-1)[:, :, :3]
    nd = jnp.take_along_axis(d, idx, axis=-1)
    inv = 1.0 / (nd + 1e-8)
    w = inv / jnp.sum(inv, -1, keepdims=True)
    gathered = jax.vmap(lambda pts, ids: pts[ids])(points2, idx)   # (B, N1, 3, C2)
    interp = jnp.sum(w[..., None] * gathered, axis=2)              # (B, N1, C2)
    h = (jnp.einsum('bnc,ch->bnh', interp, w1a)
         + jnp.einsum('bnc,ch->bnh', points1, w1b))
    h = jnp.maximum(h * s1[None] + t1[None], 0.0)
    h = jnp.einsum('bnh,hk->bnk', h, w2)
    h = jnp.maximum(h * s2[None] + t2[None], 0.0)
    return h


if __name__ == "__main__":
    key = jax.random.PRNGKey(0)
    B, N1, N2, C1, C2 = 2, 16, 8, 6, 10
    mlp = [16, 32]

    k1, k2, k3, k4, kp = jax.random.split(key, 5)
    xyz1 = jax.random.normal(k1, (B, N1, 3), jnp.float32)
    xyz2 = jax.random.normal(k2, (B, N2, 3), jnp.float32)
    points1 = jax.random.normal(k3, (B, N1, C1), jnp.float32)
    points2 = jax.random.normal(k4, (B, N2, C2), jnp.float32)
    params = make_params(kp, C1, C2, mlp)

    ref = ref_forward(xyz1, xyz2, points1, points2, params)

    # exact-algorithm check (f32 MXU operands, exact reciprocal)
    out_f32 = pointnet_fp_forward(xyz1, xyz2, points1, points2, params,
                                  mxu_dtype=jnp.float32)
    out_f32 = jax.block_until_ready(out_f32)
    assert out_f32.shape == (B, N1, mlp[-1]), out_f32.shape
    err32 = float(jnp.max(jnp.abs(out_f32 - ref)))
    assert jnp.allclose(out_f32, ref, atol=1e-2, rtol=1e-2), err32

    # default perf path (bf16 MXU operands, f32 accumulation)
    out = pointnet_fp_forward(xyz1, xyz2, points1, points2, params)
    out = jax.block_until_ready(out)
    assert out.shape == (B, N1, mlp[-1]), out.shape
    err_bf16 = float(jnp.max(jnp.abs(out - ref)))
    assert jnp.allclose(out, ref, atol=5e-2, rtol=5e-2), err_bf16

    print("KERNEL_OK")
</pallas_src>

<mosaic_0001>
module attributes {stable_mosaic.version = 11 : i64} {
  func.func @_fp_kernel(%arg0: i32, %arg1: i32, %arg2: memref<1x16x3xf32, #tpu.memory_space<vmem>>, %arg3: memref<1x3x128xf32, #tpu.memory_space<vmem>>, %arg4: memref<1x16x128xf32, #tpu.memory_space<vmem>>, %arg5: memref<1x128x128xf32, #tpu.memory_space<vmem>>, %arg6: memref<128x128xf32, #tpu.memory_space<vmem>>, %arg7: memref<128x128xf32, #tpu.memory_space<vmem>>, %arg8: memref<1x128xf32, #tpu.memory_space<vmem>>, %arg9: memref<1x128xf32, #tpu.memory_space<vmem>>, %arg10: memref<128x128xf32, #tpu.memory_space<vmem>>, %arg11: memref<1x128xf32, #tpu.memory_space<vmem>>, %arg12: memref<1x128xf32, #tpu.memory_space<vmem>>, %arg13: memref<1x16x128xf32, #tpu.memory_space<vmem>>) attributes {dimension_semantics = [#tpu.dimension_semantics<parallel>, #tpu.dimension_semantics<parallel>], iteration_bounds = array<i64: 2, 1>, scalar_prefetch = 0 : i64, scratch_operands = 0 : i64, tpu.core_type = #tpu.core_type<tc>, window_params = [{transform_indices = @transform_0, window_bounds = array<i64: 1, 16, 3>}, {pipeline_mode = #tpu.pipeline_mode<synchronous>, transform_indices = @transform_1, window_bounds = array<i64: 1, 3, 128>}, {transform_indices = @transform_2, window_bounds = array<i64: 1, 16, 128>}, {pipeline_mode = #tpu.pipeline_mode<synchronous>, transform_indices = @transform_3, window_bounds = array<i64: 1, 128, 128>}, {pipeline_mode = #tpu.pipeline_mode<synchronous>, transform_indices = @transform_4, window_bounds = array<i64: 128, 128>}, {pipeline_mode = #tpu.pipeline_mode<synchronous>, transform_indices = @transform_5, window_bounds = array<i64: 128, 128>}, {pipeline_mode = #tpu.pipeline_mode<synchronous>, transform_indices = @transform_6, window_bounds = array<i64: 1, 128>}, {pipeline_mode = #tpu.pipeline_mode<synchronous>, transform_indices = @transform_7, window_bounds = array<i64: 1, 128>}, {pipeline_mode = #tpu.pipeline_mode<synchronous>, transform_indices = @transform_8, window_bounds = array<i64: 128, 128>}, {pipeline_mode = #tpu.pipeline_mode<synchronous>, transform_indices = @transform_9, window_bounds = array<i64: 1, 128>}, {pipeline_mode = #tpu.pipeline_mode<synchronous>, transform_indices = @transform_10, window_bounds = array<i64: 1, 128>}, {transform_indices = @transform_11, window_bounds = array<i64: 1, 16, 128>}]} {
    %c0 = arith.constant 0 : index
    %c0_0 = arith.constant 0 : index
    %c0_1 = arith.constant 0 : index
    %0 = vector.load %arg2[%c0, %c0_0, %c0_1] : memref<1x16x3xf32, #tpu.memory_space<vmem>>, vector<1x16x3xf32>
    %1 = vector.shape_cast %0 : vector<1x16x3xf32> to vector<16x3xf32>
    %c0_2 = arith.constant 0 : index
    %c0_3 = arith.constant 0 : index
    %c0_4 = arith.constant 0 : index
    %2 = vector.load %arg3[%c0_2, %c0_3, %c0_4] : memref<1x3x128xf32, #tpu.memory_space<vmem>>, vector<1x3x128xf32>
    %3 = vector.shape_cast %2 : vector<1x3x128xf32> to vector<3x128xf32>
    %c0_5 = arith.constant 0 : index
    %c0_6 = arith.constant 0 : index
    %c0_7 = arith.constant 0 : index
    %4 = vector.load %arg4[%c0_5, %c0_6, %c0_7] : memref<1x16x128xf32, #tpu.memory_space<vmem>>, vector<1x16x128xf32>
    %5 = vector.shape_cast %4 : vector<1x16x128xf32> to vector<16x128xf32>
    %c0_8 = arith.constant 0 : index
    %c0_9 = arith.constant 0 : index
    %c0_10 = arith.constant 0 : index
    %6 = vector.load %arg5[%c0_8, %c0_9, %c0_10] : memref<1x128x128xf32, #tpu.memory_space<vmem>>, vector<1x128x128xf32>
    %7 = vector.shape_cast %6 : vector<1x128x128xf32> to vector<128x128xf32>
    %8 = vector.extract_strided_slice %1 {offsets = [0, 0], sizes = [16, 1], strides = [1, 1]} : vector<16x3xf32> to vector<16x1xf32>
    %9 = vector.extract_strided_slice %3 {offsets = [0, 0], sizes = [1, 128], strides = [1, 1]} : vector<3x128xf32> to vector<1x128xf32>
    %10 = vector.broadcast %8 : vector<16x1xf32> to vector<16x128xf32>
    %11 = vector.broadcast %9 : vector<1x128xf32> to vector<16x128xf32>
    %12 = arith.subf %10, %11 : vector<16x128xf32>
    %13 = arith.mulf %12, %12 : vector<16x128xf32>
    %14 = vector.extract_strided_slice %1 {offsets = [0, 1], sizes = [16, 1], strides = [1, 1]} : vector<16x3xf32> to vector<16x1xf32>
    %15 = vector.extract_strided_slice %3 {offsets = [1, 0], sizes = [1, 128], strides = [1, 1]} : vector<3x128xf32> to vector<1x128xf32>
    %16 = vector.broadcast %14 : vector<16x1xf32> to vector<16x128xf32>
    %17 = vector.broadcast %15 : vector<1x128xf32> to vector<16x128xf32>
    %18 = arith.subf %16, %17 : vector<16x128xf32>
    %19 = arith.mulf %18, %18 : vector<16x128xf32>
    %20 = arith.addf %13, %19 : vector<16x128xf32>
    %21 = vector.extract_strided_slice %1 {offsets = [0, 2], sizes = [16, 1], strides = [1, 1]} : vector<16x3xf32> to vector<16x1xf32>
    %22 = vector.extract_strided_slice %3 {offsets = [2, 0], sizes = [1, 128], strides = [1, 1]} : vector<3x128xf32> to vector<1x128xf32>
    %23 = vector.broadcast %21 : vector<16x1xf32> to vector<16x128xf32>
    %24 = vector.broadcast %22 : vector<1x128xf32> to vector<16x128xf32>
    %25 = arith.subf %23, %24 : vector<16x128xf32>
    %26 = arith.mulf %25, %25 : vector<16x128xf32>
    %27 = arith.addf %20, %26 : vector<16x128xf32>
    %28 = tpu.iota {dimensions = array<i32: 1>} : vector<16x128xi32>
    %29 = tpu.bitcast %27 : vector<16x128xf32> -> vector<16x128xi32>
    %c-128_i32 = arith.constant -128 : i32
    %30 = vector.broadcast %c-128_i32 : i32 to vector<16x128xi32>
    %31 = arith.andi %29, %30 : vector<16x128xi32>
    %32 = arith.ori %31, %28 : vector<16x128xi32>
    %cst = arith.constant 0.000000e+00 : f32
    %33 = vector.broadcast %cst : f32 to vector<16x128xf32>
    %cst_11 = arith.constant 0.000000e+00 : f32
    %34 = vector.broadcast %cst_11 : f32 to vector<16x1xf32>
    %cst_12 = arith.constant dense<2147483647> : vector<16xi32>
    %35 = vector.multi_reduction <minsi>, %32, %cst_12 [1] : vector<16x128xi32> to vector<16xi32>
    %36 = vector.shape_cast %35 : vector<16xi32> to vector<16x1xi32>
    %c-128_i32_13 = arith.constant -128 : i32
    %37 = vector.broadcast %c-128_i32_13 : i32 to vector<16x1xi32>
    %38 = arith.andi %36, %37 : vector<16x1xi32>
    %39 = tpu.bitcast %38 : vector<16x1xi32> -> vector<16x1xf32>
    %40 = math.sqrt %39 : vector<16x1xf32>
    %cst_14 = arith.constant 9.99999993E-9 : f32
    %41 = vector.broadcast %cst_14 : f32 to vector<16x1xf32>
    %42 = arith.addf %40, %41 : vector<16x1xf32>
    %cst_15 = arith.constant 1.000000e+00 : f32
    %43 = vector.broadcast %cst_15 : f32 to vector<16x1xf32>
    %44 = arith.divf %43, %42 : vector<16x1xf32>
    %45 = vector.broadcast %36 : vector<16x1xi32> to vector<16x128xi32>
    %46 = arith.cmpi eq, %32, %45 : vector<16x128xi32>
    %47 = vector.shape_cast %44 : vector<16x1xf32> to vector<16x1xf32>
    %48 = vector.broadcast %47 : vector<16x1xf32> to vector<16x128xf32>
    %49 = arith.select %46, %48, %33 : vector<16x128xi1>, vector<16x128xf32>
    %50 = arith.addf %34, %44 : vector<16x1xf32>
    %c2147483647_i32 = arith.constant 2147483647 : i32
    %51 = vector.broadcast %c2147483647_i32 : i32 to vector<16x128xi32>
    %52 = arith.select %46, %51, %32 : vector<16x128xi1>, vector<16x128xi32>
    %cst_16 = arith.constant dense<2147483647> : vector<16xi32>
    %53 = vector.multi_reduction <minsi>, %52, %cst_16 [1] : vector<16x128xi32> to vector<16xi32>
    %54 = vector.shape_cast %53 : vector<16xi32> to vector<16x1xi32>
    %c-128_i32_17 = arith.constant -128 : i32
    %55 = vector.broadcast %c-128_i32_17 : i32 to vector<16x1xi32>
    %56 = arith.andi %54, %55 : vector<16x1xi32>
    %57 = tpu.bitcast %56 : vector<16x1xi32> -> vector<16x1xf32>
    %58 = math.sqrt %57 : vector<16x1xf32>
    %cst_18 = arith.constant 9.99999993E-9 : f32
    %59 = vector.broadcast %cst_18 : f32 to vector<16x1xf32>
    %60 = arith.addf %58, %59 : vector<16x1xf32>
    %cst_19 = arith.constant 1.000000e+00 : f32
    %61 = vector.broadcast %cst_19 : f32 to vector<16x1xf32>
    %62 = arith.divf %61, %60 : vector<16x1xf32>
    %63 = vector.broadcast %54 : vector<16x1xi32> to vector<16x128xi32>
    %64 = arith.cmpi eq, %52, %63 : vector<16x128xi32>
    %65 = vector.shape_cast %62 : vector<16x1xf32> to vector<16x1xf32>
    %66 = vector.broadcast %65 : vector<16x1xf32> to vector<16x128xf32>
    %67 = arith.select %64, %66, %49 : vector<16x128xi1>, vector<16x128xf32>
    %68 = arith.addf %50, %62 : vector<16x1xf32>
    %c2147483647_i32_20 = arith.constant 2147483647 : i32
    %69 = vector.broadcast %c2147483647_i32_20 : i32 to vector<16x128xi32>
    %70 = arith.select %64, %69, %52 : vector<16x128xi1>, vector<16x128xi32>
    %cst_21 = arith.constant dense<2147483647> : vector<16xi32>
    %71 = vector.multi_reduction <minsi>, %70, %cst_21 [1] : vector<16x128xi32> to vector<16xi32>
    %72 = vector.shape_cast %71 : vector<16xi32> to vector<16x1xi32>
    %c-128_i32_22 = arith.constant -128 : i32
    %73 = vector.broadcast %c-128_i32_22 : i32 to vector<16x1xi32>
    %74 = arith.andi %72, %73 : vector<16x1xi32>
    %75 = tpu.bitcast %74 : vector<16x1xi32> -> vector<16x1xf32>
    %76 = math.sqrt %75 : vector<16x1xf32>
    %cst_23 = arith.constant 9.99999993E-9 : f32
    %77 = vector.broadcast %cst_23 : f32 to vector<16x1xf32>
    %78 = arith.addf %76, %77 : vector<16x1xf32>
    %cst_24 = arith.constant 1.000000e+00 : f32
    %79 = vector.broadcast %cst_24 : f32 to vector<16x1xf32>
    %80 = arith.divf %79, %78 : vector<16x1xf32>
    %81 = vector.broadcast %72 : vector<16x1xi32> to vector<16x128xi32>
    %82 = arith.cmpi eq, %70, %81 : vector<16x128xi32>
    %83 = vector.shape_cast %80 : vector<16x1xf32> to vector<16x1xf32>
    %84 = vector.broadcast %83 : vector<16x1xf32> to vector<16x128xf32>
    %85 = arith.select %82, %84, %67 : vector<16x128xi1>, vector<16x128xf32>
    %86 = arith.addf %68, %80 : vector<16x1xf32>
    %cst_25 = arith.constant 1.000000e+00 : f32
    %87 = vector.broadcast %cst_25 : f32 to vector<16x1xf32>
    %88 = arith.divf %87, %86 : vector<16x1xf32>
    %cst_26 = arith.constant dense<0.000000e+00> : vector<16x128xf32>
    %89 = tpu.matmul %85, %7, %cst_26 {dimension_numbers = #tpu.dot_dimension_numbers<[1], [0], [0], [1], [0, 0, 1, 1], [], []>} : vector<16x128xf32>, vector<128x128xf32>, vector<16x128xf32> -> vector<16x128xf32>
    %90 = vector.broadcast %88 : vector<16x1xf32> to vector<16x128xf32>
    %91 = arith.mulf %89, %90 : vector<16x128xf32>
    %c0_27 = arith.constant 0 : index
    %c0_28 = arith.constant 0 : index
    %92 = vector.load %arg6[%c0_27, %c0_28] : memref<128x128xf32, #tpu.memory_space<vmem>>, vector<128x128xf32>
    %cst_29 = arith.constant dense<0.000000e+00> : vector<16x128xf32>
    %93 = tpu.matmul %91, %92, %cst_29 {dimension_numbers = #tpu.dot_dimension_numbers<[1], [0], [0], [1], [0, 0, 1, 1], [], []>} : vector<16x128xf32>, vector<128x128xf32>, vector<16x128xf32> -> vector<16x128xf32>
    %c0_30 = arith.constant 0 : index
    %c0_31 = arith.constant 0 : index
    %94 = vector.load %arg7[%c0_30, %c0_31] : memref<128x128xf32, #tpu.memory_space<vmem>>, vector<128x128xf32>
    %cst_32 = arith.constant dense<0.000000e+00> : vector<16x128xf32>
    %95 = tpu.matmul %5, %94, %cst_32 {dimension_numbers = #tpu.dot_dimension_numbers<[1], [0], [0], [1], [0, 0, 1, 1], [], []>} : vector<16x128xf32>, vector<128x128xf32>, vector<16x128xf32> -> vector<16x128xf32>
    %96 = arith.addf %93, %95 : vector<16x128xf32>
    %c0_33 = arith.constant 0 : index
    %c0_34 = arith.constant 0 : index
    %97 = vector.load %arg8[%c0_33, %c0_34] : memref<1x128xf32, #tpu.memory_space<vmem>>, vector<1x128xf32>
    %98 = vector.broadcast %97 : vector<1x128xf32> to vector<16x128xf32>
    %99 = arith.mulf %96, %98 : vector<16x128xf32>
    %c0_35 = arith.constant 0 : index
    %c0_36 = arith.constant 0 : index
    %100 = vector.load %arg9[%c0_35, %c0_36] : memref<1x128xf32, #tpu.memory_space<vmem>>, vector<1x128xf32>
    %101 = vector.broadcast %100 : vector<1x128xf32> to vector<16x128xf32>
    %102 = arith.addf %99, %101 : vector<16x128xf32>
    %cst_37 = arith.constant 0.000000e+00 : f32
    %103 = vector.broadcast %cst_37 : f32 to vector<16x128xf32>
    %104 = arith.maximumf %102, %103 : vector<16x128xf32>
    %c0_38 = arith.constant 0 : index
    %c0_39 = arith.constant 0 : index
    %105 = vector.load %arg10[%c0_38, %c0_39] : memref<128x128xf32, #tpu.memory_space<vmem>>, vector<128x128xf32>
    %cst_40 = arith.constant dense<0.000000e+00> : vector<16x128xf32>
    %106 = tpu.matmul %104, %105, %cst_40 {dimension_numbers = #tpu.dot_dimension_numbers<[1], [0], [0], [1], [0, 0, 1, 1], [], []>} : vector<16x128xf32>, vector<128x128xf32>, vector<16x128xf32> -> vector<16x128xf32>
    %c0_41 = arith.constant 0 : index
    %c0_42 = arith.constant 0 : index
    %107 = vector.load %arg11[%c0_41, %c0_42] : memref<1x128xf32, #tpu.memory_space<vmem>>, vector<1x128xf32>
    %108 = vector.broadcast %107 : vector<1x128xf32> to vector<16x128xf32>
    %109 = arith.mulf %106, %108 : vector<16x128xf32>
    %c0_43 = arith.constant 0 : index
    %c0_44 = arith.constant 0 : index
    %110 = vector.load %arg12[%c0_43, %c0_44] : memref<1x128xf32, #tpu.memory_space<vmem>>, vector<1x128xf32>
    %111 = vector.broadcast %110 : vector<1x128xf32> to vector<16x128xf32>
    %112 = arith.addf %109, %111 : vector<16x128xf32>
    %cst_45 = arith.constant 0.000000e+00 : f32
    %113 = vector.broadcast %cst_45 : f32 to vector<16x128xf32>
    %114 = arith.maximumf %112, %113 : vector<16x128xf32>
    %c0_46 = arith.constant 0 : index
    %c0_47 = arith.constant 0 : index
    %c0_48 = arith.constant 0 : index
    %115 = vector.load %arg13[%c0_46, %c0_47, %c0_48] : memref<1x16x128xf32, #tpu.memory_space<vmem>>, vector<1x16x128xf32>
    %116 = vector.shape_cast %115 : vector<1x16x128xf32> to vector<16x128xf32>
    %117 = vector.shape_cast %114 : vector<16x128xf32> to vector<1x16x128xf32>
    tpu.vector_store %arg13[%c0_46, %c0_47, %c0_48], %117 {strides = array<i32>} : memref<1x16x128xf32, #tpu.memory_space<vmem>>, vector<1x16x128xf32>,
    return
  }
  func.func @transform_0(%arg0: i32, %arg1: i32) -> (i32, i32, i32) {
    %c0_i32 = arith.constant 0 : i32
    %c0_i32_0 = arith.constant 0 : i32
    return %arg0, %arg1, %c0_i32 : i32, i32, i32
  }
  func.func @transform_1(%arg0: i32, %arg1: i32) -> (i32, i32, i32) {
    %c0_i32 = arith.constant 0 : i32
    %c0_i32_0 = arith.constant 0 : i32
    %c0_i32_1 = arith.constant 0 : i32
    return %arg0, %c0_i32, %c0_i32_0 : i32, i32, i32
  }
  func.func @transform_2(%arg0: i32, %arg1: i32) -> (i32, i32, i32) {
    %c0_i32 = arith.constant 0 : i32
    %c0_i32_0 = arith.constant 0 : i32
    return %arg0, %arg1, %c0_i32 : i32, i32, i32
  }
  func.func @transform_3(%arg0: i32, %arg1: i32) -> (i32, i32, i32) {
    %c0_i32 = arith.constant 0 : i32
    %c0_i32_0 = arith.constant 0 : i32
    %c0_i32_1 = arith.constant 0 : i32
    return %arg0, %c0_i32, %c0_i32_0 : i32, i32, i32
  }
  func.func @transform_4(%arg0: i32, %arg1: i32) -> (i32, i32) {
    %c0_i32 = arith.constant 0 : i32
    %c0_i32_0 = arith.constant 0 : i32
    %c0_i32_1 = arith.constant 0 : i32
    return %c0_i32, %c0_i32_0 : i32, i32
  }
  func.func @transform_5(%arg0: i32, %arg1: i32) -> (i32, i32) {
    %c0_i32 = arith.constant 0 : i32
    %c0_i32_0 = arith.constant 0 : i32
    %c0_i32_1 = arith.constant 0 : i32
    return %c0_i32, %c0_i32_0 : i32, i32
  }
  func.func @transform_6(%arg0: i32, %arg1: i32) -> (i32, i32) {
    %c0_i32 = arith.constant 0 : i32
    %c0_i32_0 = arith.constant 0 : i32
    %c0_i32_1 = arith.constant 0 : i32
    return %c0_i32, %c0_i32_0 : i32, i32
  }
  func.func @transform_7(%arg0: i32, %arg1: i32) -> (i32, i32) {
    %c0_i32 = arith.constant 0 : i32
    %c0_i32_0 = arith.constant 0 : i32
    %c0_i32_1 = arith.constant 0 : i32
    return %c0_i32, %c0_i32_0 : i32, i32
  }
  func.func @transform_8(%arg0: i32, %arg1: i32) -> (i32, i32) {
    %c0_i32 = arith.constant 0 : i32
    %c0_i32_0 = arith.constant 0 : i32
    %c0_i32_1 = arith.constant 0 : i32
    return %c0_i32, %c0_i32_0 : i32, i32
  }
  func.func @transform_9(%arg0: i32, %arg1: i32) -> (i32, i32) {
    %c0_i32 = arith.constant 0 : i32
    %c0_i32_0 = arith.constant 0 : i32
    %c0_i32_1 = arith.constant 0 : i32
    return %c0_i32, %c0_i32_0 : i32, i32
  }
  func.func @transform_10(%arg0: i32, %arg1: i32) -> (i32, i32) {
    %c0_i32 = arith.constant 0 : i32
    %c0_i32_0 = arith.constant 0 : i32
    %c0_i32_1 = arith.constant 0 : i32
    return %c0_i32, %c0_i32_0 : i32, i32
  }
  func.func @transform_11(%arg0: i32, %arg1: i32) -> (i32, i32, i32) {
    %c0_i32 = arith.constant 0 : i32
    %c0_i32_0 = arith.constant 0 : i32
    return %arg0, %arg1, %c0_i32 : i32, i32, i32
  }
}

module attributes {stable_mosaic.version = 11 : i64} {
  func.func @_fp_kernel(%arg0: i32, %arg1: i32, %arg2: memref<1x16x3xf32, #tpu.memory_space<vmem>>, %arg3: memref<1x3x128xf32, #tpu.memory_space<vmem>>, %arg4: memref<1x16x128xf32, #tpu.memory_space<vmem>>, %arg5: memref<1x128x128xf32, #tpu.memory_space<vmem>>, %arg6: memref<128x128xf32, #tpu.memory_space<vmem>>, %arg7: memref<128x128xf32, #tpu.memory_space<vmem>>, %arg8: memref<1x128xf32, #tpu.memory_space<vmem>>, %arg9: memref<1x128xf32, #tpu.memory_space<vmem>>, %arg10: memref<128x128xf32, #tpu.memory_space<vmem>>, %arg11: memref<1x128xf32, #tpu.memory_space<vmem>>, %arg12: memref<1x128xf32, #tpu.memory_space<vmem>>, %arg13: memref<1x16x128xf32, #tpu.memory_space<vmem>>) attributes {dimension_semantics = [#tpu.dimension_semantics<parallel>, #tpu.dimension_semantics<parallel>], iteration_bounds = array<i64: 2, 1>, scalar_prefetch = 0 : i64, scratch_operands = 0 : i64, tpu.core_type = #tpu.core_type<tc>, window_params = [{transform_indices = @transform_0, window_bounds = array<i64: 1, 16, 3>}, {transform_indices = @transform_1, window_bounds = array<i64: 1, 3, 128>}, {transform_indices = @transform_2, window_bounds = array<i64: 1, 16, 128>}, {transform_indices = @transform_3, window_bounds = array<i64: 1, 128, 128>}, {pipeline_mode = #tpu.pipeline_mode<synchronous>, transform_indices = @transform_4, window_bounds = array<i64: 128, 128>}, {pipeline_mode = #tpu.pipeline_mode<synchronous>, transform_indices = @transform_5, window_bounds = array<i64: 128, 128>}, {pipeline_mode = #tpu.pipeline_mode<synchronous>, transform_indices = @transform_6, window_bounds = array<i64: 1, 128>}, {pipeline_mode = #tpu.pipeline_mode<synchronous>, transform_indices = @transform_7, window_bounds = array<i64: 1, 128>}, {pipeline_mode = #tpu.pipeline_mode<synchronous>, transform_indices = @transform_8, window_bounds = array<i64: 128, 128>}, {pipeline_mode = #tpu.pipeline_mode<synchronous>, transform_indices = @transform_9, window_bounds = array<i64: 1, 128>}, {pipeline_mode = #tpu.pipeline_mode<synchronous>, transform_indices = @transform_10, window_bounds = array<i64: 1, 128>}, {transform_indices = @transform_11, window_bounds = array<i64: 1, 16, 128>}]} {
    %c0 = arith.constant 0 : index
    %c0_0 = arith.constant 0 : index
    %c0_1 = arith.constant 0 : index
    %0 = vector.load %arg2[%c0, %c0_0, %c0_1] : memref<1x16x3xf32, #tpu.memory_space<vmem>>, vector<1x16x3xf32>
    %1 = vector.shape_cast %0 : vector<1x16x3xf32> to vector<16x3xf32>
    %c0_2 = arith.constant 0 : index
    %c0_3 = arith.constant 0 : index
    %c0_4 = arith.constant 0 : index
    %2 = vector.load %arg3[%c0_2, %c0_3, %c0_4] : memref<1x3x128xf32, #tpu.memory_space<vmem>>, vector<1x3x128xf32>
    %3 = vector.shape_cast %2 : vector<1x3x128xf32> to vector<3x128xf32>
    %c0_5 = arith.constant 0 : index
    %c0_6 = arith.constant 0 : index
    %c0_7 = arith.constant 0 : index
    %4 = vector.load %arg4[%c0_5, %c0_6, %c0_7] : memref<1x16x128xf32, #tpu.memory_space<vmem>>, vector<1x16x128xf32>
    %5 = vector.shape_cast %4 : vector<1x16x128xf32> to vector<16x128xf32>
    %c0_8 = arith.constant 0 : index
    %c0_9 = arith.constant 0 : index
    %c0_10 = arith.constant 0 : index
    %6 = vector.load %arg5[%c0_8, %c0_9, %c0_10] : memref<1x128x128xf32, #tpu.memory_space<vmem>>, vector<1x128x128xf32>
    %7 = vector.shape_cast %6 : vector<1x128x128xf32> to vector<128x128xf32>
    %8 = vector.extract_strided_slice %1 {offsets = [0, 0], sizes = [16, 1], strides = [1, 1]} : vector<16x3xf32> to vector<16x1xf32>
    %9 = vector.extract_strided_slice %3 {offsets = [0, 0], sizes = [1, 128], strides = [1, 1]} : vector<3x128xf32> to vector<1x128xf32>
    %10 = vector.broadcast %8 : vector<16x1xf32> to vector<16x128xf32>
    %11 = vector.broadcast %9 : vector<1x128xf32> to vector<16x128xf32>
    %12 = arith.subf %10, %11 : vector<16x128xf32>
    %13 = arith.mulf %12, %12 : vector<16x128xf32>
    %14 = vector.extract_strided_slice %1 {offsets = [0, 1], sizes = [16, 1], strides = [1, 1]} : vector<16x3xf32> to vector<16x1xf32>
    %15 = vector.extract_strided_slice %3 {offsets = [1, 0], sizes = [1, 128], strides = [1, 1]} : vector<3x128xf32> to vector<1x128xf32>
    %16 = vector.broadcast %14 : vector<16x1xf32> to vector<16x128xf32>
    %17 = vector.broadcast %15 : vector<1x128xf32> to vector<16x128xf32>
    %18 = arith.subf %16, %17 : vector<16x128xf32>
    %19 = arith.mulf %18, %18 : vector<16x128xf32>
    %20 = arith.addf %13, %19 : vector<16x128xf32>
    %21 = vector.extract_strided_slice %1 {offsets = [0, 2], sizes = [16, 1], strides = [1, 1]} : vector<16x3xf32> to vector<16x1xf32>
    %22 = vector.extract_strided_slice %3 {offsets = [2, 0], sizes = [1, 128], strides = [1, 1]} : vector<3x128xf32> to vector<1x128xf32>
    %23 = vector.broadcast %21 : vector<16x1xf32> to vector<16x128xf32>
    %24 = vector.broadcast %22 : vector<1x128xf32> to vector<16x128xf32>
    %25 = arith.subf %23, %24 : vector<16x128xf32>
    %26 = arith.mulf %25, %25 : vector<16x128xf32>
    %27 = arith.addf %20, %26 : vector<16x128xf32>
    %28 = tpu.iota {dimensions = array<i32: 1>} : vector<16x128xi32>
    %29 = tpu.bitcast %27 : vector<16x128xf32> -> vector<16x128xi32>
    %c-128_i32 = arith.constant -128 : i32
    %30 = vector.broadcast %c-128_i32 : i32 to vector<16x128xi32>
    %31 = arith.andi %29, %30 : vector<16x128xi32>
    %32 = arith.ori %31, %28 : vector<16x128xi32>
    %cst = arith.constant 0.000000e+00 : f32
    %33 = vector.broadcast %cst : f32 to vector<16x128xf32>
    %cst_11 = arith.constant 0.000000e+00 : f32
    %34 = vector.broadcast %cst_11 : f32 to vector<16x1xf32>
    %cst_12 = arith.constant dense<2147483647> : vector<16xi32>
    %35 = vector.multi_reduction <minsi>, %32, %cst_12 [1] : vector<16x128xi32> to vector<16xi32>
    %36 = vector.shape_cast %35 : vector<16xi32> to vector<16x1xi32>
    %c-128_i32_13 = arith.constant -128 : i32
    %37 = vector.broadcast %c-128_i32_13 : i32 to vector<16x1xi32>
    %38 = arith.andi %36, %37 : vector<16x1xi32>
    %39 = tpu.bitcast %38 : vector<16x1xi32> -> vector<16x1xf32>
    %40 = math.sqrt %39 : vector<16x1xf32>
    %cst_14 = arith.constant 9.99999993E-9 : f32
    %41 = vector.broadcast %cst_14 : f32 to vector<16x1xf32>
    %42 = arith.addf %40, %41 : vector<16x1xf32>
    %cst_15 = arith.constant 1.000000e+00 : f32
    %43 = vector.broadcast %cst_15 : f32 to vector<16x1xf32>
    %44 = arith.divf %43, %42 : vector<16x1xf32>
    %45 = vector.broadcast %36 : vector<16x1xi32> to vector<16x128xi32>
    %46 = arith.cmpi eq, %32, %45 : vector<16x128xi32>
    %47 = vector.shape_cast %44 : vector<16x1xf32> to vector<16x1xf32>
    %48 = vector.broadcast %47 : vector<16x1xf32> to vector<16x128xf32>
    %49 = arith.select %46, %48, %33 : vector<16x128xi1>, vector<16x128xf32>
    %50 = arith.addf %34, %44 : vector<16x1xf32>
    %c2147483647_i32 = arith.constant 2147483647 : i32
    %51 = vector.broadcast %c2147483647_i32 : i32 to vector<16x128xi32>
    %52 = arith.select %46, %51, %32 : vector<16x128xi1>, vector<16x128xi32>
    %cst_16 = arith.constant dense<2147483647> : vector<16xi32>
    %53 = vector.multi_reduction <minsi>, %52, %cst_16 [1] : vector<16x128xi32> to vector<16xi32>
    %54 = vector.shape_cast %53 : vector<16xi32> to vector<16x1xi32>
    %c-128_i32_17 = arith.constant -128 : i32
    %55 = vector.broadcast %c-128_i32_17 : i32 to vector<16x1xi32>
    %56 = arith.andi %54, %55 : vector<16x1xi32>
    %57 = tpu.bitcast %56 : vector<16x1xi32> -> vector<16x1xf32>
    %58 = math.sqrt %57 : vector<16x1xf32>
    %cst_18 = arith.constant 9.99999993E-9 : f32
    %59 = vector.broadcast %cst_18 : f32 to vector<16x1xf32>
    %60 = arith.addf %58, %59 : vector<16x1xf32>
    %cst_19 = arith.constant 1.000000e+00 : f32
    %61 = vector.broadcast %cst_19 : f32 to vector<16x1xf32>
    %62 = arith.divf %61, %60 : vector<16x1xf32>
    %63 = vector.broadcast %54 : vector<16x1xi32> to vector<16x128xi32>
    %64 = arith.cmpi eq, %52, %63 : vector<16x128xi32>
    %65 = vector.shape_cast %62 : vector<16x1xf32> to vector<16x1xf32>
    %66 = vector.broadcast %65 : vector<16x1xf32> to vector<16x128xf32>
    %67 = arith.select %64, %66, %49 : vector<16x128xi1>, vector<16x128xf32>
    %68 = arith.addf %50, %62 : vector<16x1xf32>
    %c2147483647_i32_20 = arith.constant 2147483647 : i32
    %69 = vector.broadcast %c2147483647_i32_20 : i32 to vector<16x128xi32>
    %70 = arith.select %64, %69, %52 : vector<16x128xi1>, vector<16x128xi32>
    %cst_21 = arith.constant dense<2147483647> : vector<16xi32>
    %71 = vector.multi_reduction <minsi>, %70, %cst_21 [1] : vector<16x128xi32> to vector<16xi32>
    %72 = vector.shape_cast %71 : vector<16xi32> to vector<16x1xi32>
    %c-128_i32_22 = arith.constant -128 : i32
    %73 = vector.broadcast %c-128_i32_22 : i32 to vector<16x1xi32>
    %74 = arith.andi %72, %73 : vector<16x1xi32>
    %75 = tpu.bitcast %74 : vector<16x1xi32> -> vector<16x1xf32>
    %76 = math.sqrt %75 : vector<16x1xf32>
    %cst_23 = arith.constant 9.99999993E-9 : f32
    %77 = vector.broadcast %cst_23 : f32 to vector<16x1xf32>
    %78 = arith.addf %76, %77 : vector<16x1xf32>
    %cst_24 = arith.constant 1.000000e+00 : f32
    %79 = vector.broadcast %cst_24 : f32 to vector<16x1xf32>
    %80 = arith.divf %79, %78 : vector<16x1xf32>
    %81 = vector.broadcast %72 : vector<16x1xi32> to vector<16x128xi32>
    %82 = arith.cmpi eq, %70, %81 : vector<16x128xi32>
    %83 = vector.shape_cast %80 : vector<16x1xf32> to vector<16x1xf32>
    %84 = vector.broadcast %83 : vector<16x1xf32> to vector<16x128xf32>
    %85 = arith.select %82, %84, %67 : vector<16x128xi1>, vector<16x128xf32>
    %86 = arith.addf %68, %80 : vector<16x1xf32>
    %cst_25 = arith.constant 1.000000e+00 : f32
    %87 = vector.broadcast %cst_25 : f32 to vector<16x1xf32>
    %88 = arith.divf %87, %86 : vector<16x1xf32>
    %cst_26 = arith.constant dense<0.000000e+00> : vector<16x128xf32>
    %89 = tpu.matmul %85, %7, %cst_26 {dimension_numbers = #tpu.dot_dimension_numbers<[1], [0], [0], [1], [0, 0, 1, 1], [], []>} : vector<16x128xf32>, vector<128x128xf32>, vector<16x128xf32> -> vector<16x128xf32>
    %90 = vector.broadcast %88 : vector<16x1xf32> to vector<16x128xf32>
    %91 = arith.mulf %89, %90 : vector<16x128xf32>
    %c0_27 = arith.constant 0 : index
    %c0_28 = arith.constant 0 : index
    %92 = vector.load %arg6[%c0_27, %c0_28] : memref<128x128xf32, #tpu.memory_space<vmem>>, vector<128x128xf32>
    %cst_29 = arith.constant dense<0.000000e+00> : vector<16x128xf32>
    %93 = tpu.matmul %91, %92, %cst_29 {dimension_numbers = #tpu.dot_dimension_numbers<[1], [0], [0], [1], [0, 0, 1, 1], [], []>} : vector<16x128xf32>, vector<128x128xf32>, vector<16x128xf32> -> vector<16x128xf32>
    %c0_30 = arith.constant 0 : index
    %c0_31 = arith.constant 0 : index
    %94 = vector.load %arg7[%c0_30, %c0_31] : memref<128x128xf32, #tpu.memory_space<vmem>>, vector<128x128xf32>
    %cst_32 = arith.constant dense<0.000000e+00> : vector<16x128xf32>
    %95 = tpu.matmul %5, %94, %cst_32 {dimension_numbers = #tpu.dot_dimension_numbers<[1], [0], [0], [1], [0, 0, 1, 1], [], []>} : vector<16x128xf32>, vector<128x128xf32>, vector<16x128xf32> -> vector<16x128xf32>
    %96 = arith.addf %93, %95 : vector<16x128xf32>
    %c0_33 = arith.constant 0 : index
    %c0_34 = arith.constant 0 : index
    %97 = vector.load %arg8[%c0_33, %c0_34] : memref<1x128xf32, #tpu.memory_space<vmem>>, vector<1x128xf32>
    %98 = vector.broadcast %97 : vector<1x128xf32> to vector<16x128xf32>
    %99 = arith.mulf %96, %98 : vector<16x128xf32>
    %c0_35 = arith.constant 0 : index
    %c0_36 = arith.constant 0 : index
    %100 = vector.load %arg9[%c0_35, %c0_36] : memref<1x128xf32, #tpu.memory_space<vmem>>, vector<1x128xf32>
    %101 = vector.broadcast %100 : vector<1x128xf32> to vector<16x128xf32>
    %102 = arith.addf %99, %101 : vector<16x128xf32>
    %cst_37 = arith.constant 0.000000e+00 : f32
    %103 = vector.broadcast %cst_37 : f32 to vector<16x128xf32>
    %104 = arith.maximumf %102, %103 : vector<16x128xf32>
    %c0_38 = arith.constant 0 : index
    %c0_39 = arith.constant 0 : index
    %105 = vector.load %arg10[%c0_38, %c0_39] : memref<128x128xf32, #tpu.memory_space<vmem>>, vector<128x128xf32>
    %cst_40 = arith.constant dense<0.000000e+00> : vector<16x128xf32>
    %106 = tpu.matmul %104, %105, %cst_40 {dimension_numbers = #tpu.dot_dimension_numbers<[1], [0], [0], [1], [0, 0, 1, 1], [], []>} : vector<16x128xf32>, vector<128x128xf32>, vector<16x128xf32> -> vector<16x128xf32>
    %c0_41 = arith.constant 0 : index
    %c0_42 = arith.constant 0 : index
    %107 = vector.load %arg11[%c0_41, %c0_42] : memref<1x128xf32, #tpu.memory_space<vmem>>, vector<1x128xf32>
    %108 = vector.broadcast %107 : vector<1x128xf32> to vector<16x128xf32>
    %109 = arith.mulf %106, %108 : vector<16x128xf32>
    %c0_43 = arith.constant 0 : index
    %c0_44 = arith.constant 0 : index
    %110 = vector.load %arg12[%c0_43, %c0_44] : memref<1x128xf32, #tpu.memory_space<vmem>>, vector<1x128xf32>
    %111 = vector.broadcast %110 : vector<1x128xf32> to vector<16x128xf32>
    %112 = arith.addf %109, %111 : vector<16x128xf32>
    %cst_45 = arith.constant 0.000000e+00 : f32
    %113 = vector.broadcast %cst_45 : f32 to vector<16x128xf32>
    %114 = arith.maximumf %112, %113 : vector<16x128xf32>
    %c0_46 = arith.constant 0 : index
    %c0_47 = arith.constant 0 : index
    %c0_48 = arith.constant 0 : index
    %115 = vector.load %arg13[%c0_46, %c0_47, %c0_48] : memref<1x16x128xf32, #tpu.memory_space<vmem>>, vector<1x16x128xf32>
    %116 = vector.shape_cast %115 : vector<1x16x128xf32> to vector<16x128xf32>
    %117 = vector.shape_cast %114 : vector<16x128xf32> to vector<1x16x128xf32>
    tpu.vector_store %arg13[%c0_46, %c0_47, %c0_48], %117 {strides = array<i32>} : memref<1x16x128xf32, #tpu.memory_space<vmem>>, vector<1x16x128xf32>,
    return
  }
  func.func @transform_0(%arg0: i32, %arg1: i32) -> (i32, i32, i32) {
    %c0_i32 = arith.constant 0 : i32
    %c0_i32_0 = arith.constant 0 : i32
    return %arg0, %arg1, %c0_i32 : i32, i32, i32
  }
  func.func @transform_1(%arg0: i32, %arg1: i32) -> (i32, i32, i32) {
    %c0_i32 = arith.constant 0 : i32
    %c0_i32_0 = arith.constant 0 : i32
    %c0_i32_1 = arith.constant 0 : i32
    return %arg0, %c0_i32, %c0_i32_0 : i32, i32, i32
  }
  func.func @transform_2(%arg0: i32, %arg1: i32) -> (i32, i32, i32) {
    %c0_i32 = arith.constant 0 : i32
    %c0_i32_0 = arith.constant 0 : i32
    return %arg0, %arg1, %c0_i32 : i32, i32, i32
  }
  func.func @transform_3(%arg0: i32, %arg1: i32) -> (i32, i32, i32) {
    %c0_i32 = arith.constant 0 : i32
    %c0_i32_0 = arith.constant 0 : i32
    %c0_i32_1 = arith.constant 0 : i32
    return %arg0, %c0_i32, %c0_i32_0 : i32, i32, i32
  }
  func.func @transform_4(%arg0: i32, %arg1: i32) -> (i32, i32) {
    %c0_i32 = arith.constant 0 : i32
    %c0_i32_0 = arith.constant 0 : i32
    %c0_i32_1 = arith.constant 0 : i32
    return %c0_i32, %c0_i32_0 : i32, i32
  }
  func.func @transform_5(%arg0: i32, %arg1: i32) -> (i32, i32) {
    %c0_i32 = arith.constant 0 : i32
    %c0_i32_0 = arith.constant 0 : i32
    %c0_i32_1 = arith.constant 0 : i32
    return %c0_i32, %c0_i32_0 : i32, i32
  }
  func.func @transform_6(%arg0: i32, %arg1: i32) -> (i32, i32) {
    %c0_i32 = arith.constant 0 : i32
    %c0_i32_0 = arith.constant 0 : i32
    %c0_i32_1 = arith.constant 0 : i32
    return %c0_i32, %c0_i32_0 : i32, i32
  }
  func.func @transform_7(%arg0: i32, %arg1: i32) -> (i32, i32) {
    %c0_i32 = arith.constant 0 : i32
    %c0_i32_0 = arith.constant 0 : i32
    %c0_i32_1 = arith.constant 0 : i32
    return %c0_i32, %c0_i32_0 : i32, i32
  }
  func.func @transform_8(%arg0: i32, %arg1: i32) -> (i32, i32) {
    %c0_i32 = arith.constant 0 : i32
    %c0_i32_0 = arith.constant 0 : i32
    %c0_i32_1 = arith.constant 0 : i32
    return %c0_i32, %c0_i32_0 : i32, i32
  }
  func.func @transform_9(%arg0: i32, %arg1: i32) -> (i32, i32) {
    %c0_i32 = arith.constant 0 : i32
    %c0_i32_0 = arith.constant 0 : i32
    %c0_i32_1 = arith.constant 0 : i32
    return %c0_i32, %c0_i32_0 : i32, i32
  }
  func.func @transform_10(%arg0: i32, %arg1: i32) -> (i32, i32) {
    %c0_i32 = arith.constant 0 : i32
    %c0_i32_0 = arith.constant 0 : i32
    %c0_i32_1 = arith.constant 0 : i32
    return %c0_i32, %c0_i32_0 : i32, i32
  }
  func.func @transform_11(%arg0: i32, %arg1: i32) -> (i32, i32, i32) {
    %c0_i32 = arith.constant 0 : i32
    %c0_i32_0 = arith.constant 0 : i32
    return %arg0, %arg1, %c0_i32 : i32, i32, i32
  }
}

</mosaic_0001>

<llo_original>
// kernel: tpu_custom_call.1
$region0: #{tpu_custom_call.1}
  #allocation0 [shape = 'u32[]', space=smem, size = 0x4, offset = 0x4, fixed_abs, tag = 'smem constant byte address 0x4 - core index']
  #allocation1 [shape = 'u32[72,128]{1,0:T(1,128)}', space=vmem, size = 0x9000, scoped, tag = 'internal scratch']
  %s0 = inlined_call_operand.vmem [shape: f32[2,16,3], index: 0, kind: input, shape index: {}]
  %s1 = inlined_call_operand.vmem [shape: f32[2,3,128], index: 1, kind: input, shape index: {}]
  %s2 = inlined_call_operand.vmem [shape: f32[2,16,128], index: 2, kind: input, shape index: {}]
  %s3 = inlined_call_operand.hbm [shape: f32[2,128,128], index: 3, kind: input, shape index: {}]
  %s4 = inlined_call_operand.hbm [shape: f32[128,128], index: 4, kind: input, shape index: {}]
  %s5 = inlined_call_operand.hbm [shape: f32[128,128], index: 5, kind: input, shape index: {}]
  %s6 = inlined_call_operand.vmem [shape: f32[1,128], index: 6, kind: input, shape index: {}]
  %s7 = inlined_call_operand.vmem [shape: f32[1,128], index: 7, kind: input, shape index: {}]
  %s8 = inlined_call_operand.hbm [shape: f32[128,128], index: 8, kind: input, shape index: {}]
  %s9 = inlined_call_operand.vmem [shape: f32[1,128], index: 9, kind: input, shape index: {}]
  %s10 = inlined_call_operand.vmem [shape: f32[1,128], index: 10, kind: input, shape index: {}]
  %s11 = inlined_call_operand.hbm [shape: f32[2,16,128], index: 11, kind: output, shape index: {}]
  %s12 = sld [smem:[#allocation0]]
  $region93: #{tpu_custom_call.1} parent=0
    _
  %s14 = ssub.s32 1, %s12
  %s15 = scalar_select 0, %s14, %s12
  $region1: #{tpu_custom_call.1} parent=0
    #allocation2 [shape = 'u8[65536]{0}', space=vmem, size = 0x10000, scoped, tag = 'input window, operand 3, single buffered']
    #allocation3 [shape = 's32[2]{0}', space=sflag, size = 0x8, scoped, tag = 'scoped memory for tpu_custom_call.1']
    #allocation4 [shape = 's32[2]{0}', space=sflag, size = 0x8, scoped, tag = 'scoped memory for tpu_custom_call.1']
    #allocation5 [shape = 'u8[65536]{0}', space=vmem, size = 0x10000, scoped, tag = 'input window, operand 4, single buffered']
    #allocation6 [shape = 's32[1]{0}', space=sflag, size = 0x4, scoped, tag = 'scoped memory for tpu_custom_call.1']
    #allocation7 [shape = 'u8[65536]{0}', space=vmem, size = 0x10000, scoped, tag = 'input window, operand 5, single buffered']
    #allocation8 [shape = 'u8[65536]{0}', space=vmem, size = 0x10000, scoped, tag = 'input window, operand 8, single buffered']
    #allocation9 [shape = 's32[1]{0}', space=sflag, size = 0x4, scoped, tag = 'scoped memory for tpu_custom_call.1']
    #allocation10 [shape = 'u8[16384]{0}', space=vmem, size = 0x4000, scoped, tag = 'output window, operand 0']
    %16 = vsyncpa [#allocation3], 0
    %17 = vsyncpa [#allocation6], 0
    %18 = vsyncpa [#allocation9], 0
    %19 = vsyncpa [#allocation4], 0
    %s20 = scalar_lea.sflag [#allocation4], 1
    %21 = vsyncpa %s20, 0
    loop: start=0, step=1, limit=4
    $region2: #{tpu_custom_call.1} parent=1 // loop_pre_header
      _
    $region3: #{tpu_custom_call.1} parent=1 // loop_header
      %s23 = sphi 0, %s27
      %p24 = scmp.ge.s32.totalorder %s23, 4
      %s30 = sphi 0, %s42
      %s31 = sphi 0, %s38
      %s32 = sphi 0, %s30
      %s33 = sphi 0, %s31
      %s34 = sphi 0, %s32
      %s35 = sphi 0, %s33
      %s47 = sphi 0, %s49
      %s50 = sphi 0, %s47
      %s51 = sphi 0, %s50
      %s67 = sphi 0, %s51
      %s73 = sphi 0, %s75
      %s76 = sphi 0, %s73
      %s77 = sphi 0, %s76
      %s93 = sphi 0, %s77
      %s101 = sphi 0, %s103
      %s104 = sphi 0, %s101
      %s105 = sphi 0, %s104
      %s121 = sphi 0, %s105
      %s127 = sphi 0, %s129
      %s130 = sphi 0, %s127
      %s131 = sphi 0, %s130
      %s147 = sphi 0, %s131
      %s151 = sphi 0, %s151
      %s153 = sphi 0, %s151
      %s154 = sphi 0, %s153
      %s168 = sphi 0, %s154
      %s172 = sphi 0, %s172
      %s174 = sphi 0, %s172
      %s175 = sphi 0, %s174
      %s189 = sphi 0, %s175
      %s193 = sphi 0, %s193
      %s195 = sphi 0, %s193
      %s196 = sphi 0, %s195
      %s210 = sphi 0, %s196
      %s214 = sphi 0, %s214
      %s216 = sphi 0, %s214
      %s217 = sphi 0, %s216
      %s231 = sphi 0, %s217
      %s235 = sphi 0, %s235
      %s237 = sphi 0, %s235
      %s238 = sphi 0, %s237
      %s252 = sphi 0, %s238
      %s256 = sphi 0, %s256
      %s258 = sphi 0, %s256
      %s259 = sphi 0, %s258
      %s273 = sphi 0, %s259
      %s277 = sphi 0, %s277
      %s279 = sphi 0, %s277
      %s280 = sphi 0, %s279
      %s294 = sphi 0, %s280
      %s302 = sphi 0, %s304
      %s305 = sphi 0, %s302
      %s306 = sphi 0, %s305
      %s322 = sphi 0, %s306
    $region4: #{tpu_custom_call.1} parent=1 // loop_header_branch
      %26 = sbr.rel (%p24) target = $region8
    $region5: #{tpu_custom_call.1} parent=1 // loop_body
      %s28 = ssub.s32 %s23, 1
      %s29 = ssub.s32 %s23, 2
      %s36 = sadd.s32 1, %s31
      %p37 = scmp.ge.s32.totalorder %s36, 1
      %s38 = scalar_select %p37, 0, %s36
      %s39 = sadd.s32 1, %s30
      %s40 = scalar_select %p37, %s39, %s30
      %p41 = scmp.ge.s32.totalorder %s40, 2
      %s42 = scalar_select %p41, 0, %s40
      %s43 = ssub.s32 %s30, %s42
      %s44 = ssub.s32 %s31, %s38
      %s45 = sor.u32 %s43, %s44
      %p46 = scmp.eq.s32.totalorder %s45, 0
      %s48 = sadd.s32 %s47, 1
      %s49 = scalar_select %p46, %s47, %s48
      %p52 = pneg %p46
      %p53 = scmp.eq.s32.totalorder %s23, 1
      %p54 = por %p52, %p53
      %p55 = scmp.ne.s32.totalorder %s47, %s50
      %p56 = scmp.eq.s32.totalorder %s23, 0
      %p57 = por %p55, %p56
      %p58 = scmp.ne.s32.totalorder %s47, %s50
      %p59 = scmp.eq.s32.totalorder %s28, 1
      %p60 = por %p58, %p59
      %p61 = scmp.ne.s32.totalorder %s50, %s51
      %p62 = scmp.eq.s32.totalorder %s28, 0
      %p63 = por %p61, %p62
      %p64 = scmp.ne.s32.totalorder %s50, %s51
      %p65 = scmp.eq.s32.totalorder %s29, 1
      %p66 = por %p64, %p65
      %p68 = scmp.ne.s32.totalorder %s51, %s67
      %p69 = scmp.eq.s32.totalorder %s29, 0
      %p70 = por %p68, %p69
      %s71 = ssub.s32 %s30, %s42
      %p72 = scmp.eq.s32.totalorder %s71, 0
      %s74 = sadd.s32 %s73, 1
      %s75 = scalar_select %p72, %s73, %s74
      %p78 = pneg %p72
      %p79 = scmp.eq.s32.totalorder %s23, 1
      %p80 = por %p78, %p79
      %p81 = scmp.ne.s32.totalorder %s73, %s76
      %p82 = scmp.eq.s32.totalorder %s23, 0
      %p83 = por %p81, %p82
      %p84 = scmp.ne.s32.totalorder %s73, %s76
      %p85 = scmp.eq.s32.totalorder %s28, 1
      %p86 = por %p84, %p85
      %p87 = scmp.ne.s32.totalorder %s76, %s77
      %p88 = scmp.eq.s32.totalorder %s28, 0
      %p89 = por %p87, %p88
      %p90 = scmp.ne.s32.totalorder %s76, %s77
      %p91 = scmp.eq.s32.totalorder %s29, 1
      %p92 = por %p90, %p91
      %p94 = scmp.ne.s32.totalorder %s77, %s93
      %p95 = scmp.eq.s32.totalorder %s29, 0
      %p96 = por %p94, %p95
      %s97 = ssub.s32 %s30, %s42
      %s98 = ssub.s32 %s31, %s38
      %s99 = sor.u32 %s97, %s98
      %p100 = scmp.eq.s32.totalorder %s99, 0
      %s102 = sadd.s32 %s101, 1
      %s103 = scalar_select %p100, %s101, %s102
      %p106 = pneg %p100
      %p107 = scmp.eq.s32.totalorder %s23, 1
      %p108 = por %p106, %p107
      %p109 = scmp.ne.s32.totalorder %s101, %s104
      %p110 = scmp.eq.s32.totalorder %s23, 0
      %p111 = por %p109, %p110
      %p112 = scmp.ne.s32.totalorder %s101, %s104
      %p113 = scmp.eq.s32.totalorder %s28, 1
      %p114 = por %p112, %p113
      %p115 = scmp.ne.s32.totalorder %s104, %s105
      %p116 = scmp.eq.s32.totalorder %s28, 0
      %p117 = por %p115, %p116
      %p118 = scmp.ne.s32.totalorder %s104, %s105
      %p119 = scmp.eq.s32.totalorder %s29, 1
      %p120 = por %p118, %p119
      %p122 = scmp.ne.s32.totalorder %s105, %s121
      %p123 = scmp.eq.s32.totalorder %s29, 0
      %p124 = por %p122, %p123
      %s125 = ssub.s32 %s30, %s42
      %p126 = scmp.eq.s32.totalorder %s125, 0
      %s128 = sadd.s32 %s127, 1
      %s129 = scalar_select %p126, %s127, %s128
      %p132 = pneg %p126
      %p133 = scmp.eq.s32.totalorder %s23, 1
      %p134 = por %p132, %p133
      %p135 = scmp.ne.s32.totalorder %s127, %s130
      %p136 = scmp.eq.s32.totalorder %s23, 0
      %p137 = por %p135, %p136
      %p138 = scmp.ne.s32.totalorder %s127, %s130
      %p139 = scmp.eq.s32.totalorder %s28, 1
      %p140 = por %p138, %p139
      %p141 = scmp.ne.s32.totalorder %s130, %s131
      %p142 = scmp.eq.s32.totalorder %s28, 0
      %p143 = por %p141, %p142
      %p144 = scmp.ne.s32.totalorder %s130, %s131
      %p145 = scmp.eq.s32.totalorder %s29, 1
      %p146 = por %p144, %p145
      %p148 = scmp.ne.s32.totalorder %s131, %s147
      %p149 = scmp.eq.s32.totalorder %s29, 0
      %p150 = por %p148, %p149
      %s152 = sadd.s32 %s151, 1
      %p155 = scmp.eq.s32.totalorder %s23, 1
      %p156 = scmp.ne.s32.totalorder %s151, %s153
      %p157 = scmp.eq.s32.totalorder %s23, 0
      %p158 = por %p156, %p157
      %p159 = scmp.ne.s32.totalorder %s151, %s153
      %p160 = scmp.eq.s32.totalorder %s28, 1
      %p161 = por %p159, %p160
      %p162 = scmp.ne.s32.totalorder %s153, %s154
      %p163 = scmp.eq.s32.totalorder %s28, 0
      %p164 = por %p162, %p163
      %p165 = scmp.ne.s32.totalorder %s153, %s154
      %p166 = scmp.eq.s32.totalorder %s29, 1
      %p167 = por %p165, %p166
      %p169 = scmp.ne.s32.totalorder %s154, %s168
      %p170 = scmp.eq.s32.totalorder %s29, 0
      %p171 = por %p169, %p170
      %s173 = sadd.s32 %s172, 1
      %p176 = scmp.eq.s32.totalorder %s23, 1
      %p177 = scmp.ne.s32.totalorder %s172, %s174
      %p178 = scmp.eq.s32.totalorder %s23, 0
      %p179 = por %p177, %p178
      %p180 = scmp.ne.s32.totalorder %s172, %s174
      %p181 = scmp.eq.s32.totalorder %s28, 1
      %p182 = por %p180, %p181
      %p183 = scmp.ne.s32.totalorder %s174, %s175
      %p184 = scmp.eq.s32.totalorder %s28, 0
      %p185 = por %p183, %p184
      %p186 = scmp.ne.s32.totalorder %s174, %s175
      %p187 = scmp.eq.s32.totalorder %s29, 1
      %p188 = por %p186, %p187
      %p190 = scmp.ne.s32.totalorder %s175, %s189
      %p191 = scmp.eq.s32.totalorder %s29, 0
      %p192 = por %p190, %p191
      %s194 = sadd.s32 %s193, 1
      %p197 = scmp.eq.s32.totalorder %s23, 1
      %p198 = scmp.ne.s32.totalorder %s193, %s195
      %p199 = scmp.eq.s32.totalorder %s23, 0
      %p200 = por %p198, %p199
      %p201 = scmp.ne.s32.totalorder %s193, %s195
      %p202 = scmp.eq.s32.totalorder %s28, 1
      %p203 = por %p201, %p202
      %p204 = scmp.ne.s32.totalorder %s195, %s196
      %p205 = scmp.eq.s32.totalorder %s28, 0
      %p206 = por %p204, %p205
      %p207 = scmp.ne.s32.totalorder %s195, %s196
      %p208 = scmp.eq.s32.totalorder %s29, 1
      %p209 = por %p207, %p208
      %p211 = scmp.ne.s32.totalorder %s196, %s210
      %p212 = scmp.eq.s32.totalorder %s29, 0
      %p213 = por %p211, %p212
      %s215 = sadd.s32 %s214, 1
      %p218 = scmp.eq.s32.totalorder %s23, 1
      %p219 = scmp.ne.s32.totalorder %s214, %s216
      %p220 = scmp.eq.s32.totalorder %s23, 0
      %p221 = por %p219, %p220
      %p222 = scmp.ne.s32.totalorder %s214, %s216
      %p223 = scmp.eq.s32.totalorder %s28, 1
      %p224 = por %p222, %p223
      %p225 = scmp.ne.s32.totalorder %s216, %s217
      %p226 = scmp.eq.s32.totalorder %s28, 0
      %p227 = por %p225, %p226
      %p228 = scmp.ne.s32.totalorder %s216, %s217
      %p229 = scmp.eq.s32.totalorder %s29, 1
      %p230 = por %p228, %p229
      %p232 = scmp.ne.s32.totalorder %s217, %s231
      %p233 = scmp.eq.s32.totalorder %s29, 0
      %p234 = por %p232, %p233
      %s236 = sadd.s32 %s235, 1
      %p239 = scmp.eq.s32.totalorder %s23, 1
      %p240 = scmp.ne.s32.totalorder %s235, %s237
      %p241 = scmp.eq.s32.totalorder %s23, 0
      %p242 = por %p240, %p241
      %p243 = scmp.ne.s32.totalorder %s235, %s237
      %p244 = scmp.eq.s32.totalorder %s28, 1
      %p245 = por %p243, %p244
      %p246 = scmp.ne.s32.totalorder %s237, %s238
      %p247 = scmp.eq.s32.totalorder %s28, 0
      %p248 = por %p246, %p247
      %p249 = scmp.ne.s32.totalorder %s237, %s238
      %p250 = scmp.eq.s32.totalorder %s29, 1
      %p251 = por %p249, %p250
      %p253 = scmp.ne.s32.totalorder %s238, %s252
      %p254 = scmp.eq.s32.totalorder %s29, 0
      %p255 = por %p253, %p254
      %s257 = sadd.s32 %s256, 1
      %p260 = scmp.eq.s32.totalorder %s23, 1
      %p261 = scmp.ne.s32.totalorder %s256, %s258
      %p262 = scmp.eq.s32.totalorder %s23, 0
      %p263 = por %p261, %p262
      %p264 = scmp.ne.s32.totalorder %s256, %s258
      %p265 = scmp.eq.s32.totalorder %s28, 1
      %p266 = por %p264, %p265
      %p267 = scmp.ne.s32.totalorder %s258, %s259
      %p268 = scmp.eq.s32.totalorder %s28, 0
      %p269 = por %p267, %p268
      %p270 = scmp.ne.s32.totalorder %s258, %s259
      %p271 = scmp.eq.s32.totalorder %s29, 1
      %p272 = por %p270, %p271
      %p274 = scmp.ne.s32.totalorder %s259, %s273
      %p275 = scmp.eq.s32.totalorder %s29, 0
      %p276 = por %p274, %p275
      %s278 = sadd.s32 %s277, 1
      %p281 = scmp.eq.s32.totalorder %s23, 1
      %p282 = scmp.ne.s32.totalorder %s277, %s279
      %p283 = scmp.eq.s32.totalorder %s23, 0
      %p284 = por %p282, %p283
      %p285 = scmp.ne.s32.totalorder %s277, %s279
      %p286 = scmp.eq.s32.totalorder %s28, 1
      %p287 = por %p285, %p286
      %p288 = scmp.ne.s32.totalorder %s279, %s280
      %p289 = scmp.eq.s32.totalorder %s28, 0
      %p290 = por %p288, %p289
      %p291 = scmp.ne.s32.totalorder %s279, %s280
      %p292 = scmp.eq.s32.totalorder %s29, 1
      %p293 = por %p291, %p292
      %p295 = scmp.ne.s32.totalorder %s280, %s294
      %p296 = scmp.eq.s32.totalorder %s29, 0
      %p297 = por %p295, %p296
      %s298 = ssub.s32 %s30, %s42
      %s299 = ssub.s32 %s31, %s38
      %s300 = sor.u32 %s298, %s299
      %p301 = scmp.eq.s32.totalorder %s300, 0
      %s303 = sadd.s32 %s302, 1
      %s304 = scalar_select %p301, %s302, %s303
      %p307 = pneg %p301
      %p308 = scmp.eq.s32.totalorder %s23, 1
      %p309 = por %p307, %p308
      %p310 = scmp.ne.s32.totalorder %s302, %s305
      %p311 = scmp.eq.s32.totalorder %s23, 0
      %p312 = por %p310, %p311
      %p313 = scmp.ne.s32.totalorder %s302, %s305
      %p314 = scmp.eq.s32.totalorder %s28, 1
      %p315 = por %p313, %p314
      %p316 = scmp.ne.s32.totalorder %s305, %s306
      %p317 = scmp.eq.s32.totalorder %s28, 0
      %p318 = por %p316, %p317
      %p319 = scmp.ne.s32.totalorder %s305, %s306
      %p320 = scmp.eq.s32.totalorder %s29, 1
      %p321 = por %p319, %p320
      %p323 = scmp.ne.s32.totalorder %s306, %s322
      %p324 = scmp.eq.s32.totalorder %s29, 0
      %p325 = por %p323, %p324
      %p326 = scmp.le.s32.totalorder 1, %s23
      %p327 = scmp.lt.s32.totalorder %s23, 3
      %p328 = pnand %p326, %p327
      %p329 = pneg %p328
      // Predicated region
      $region9: #{tpu_custom_call.1} parent=5 // pred_check
        _
      $region10: #{tpu_custom_call.1} parent=5 // pred_check_branch
        %331 = sbr.rel (%p328) target = $region12
      $region11: #{tpu_custom_call.1} parent=5 // pred_region
        %s332 = ssub.s32 %s23, 1
        // Predicated region
        $region13: #{tpu_custom_call.1} parent=11 // pred_check
          %p333 = pneg %p89
        $region14: #{tpu_custom_call.1} parent=11 // pred_check_branch
          %335 = sbr.rel (%p333) target = $region16
        $region15: #{tpu_custom_call.1} parent=11 // pred_region
          %p336 = scmp.lt.s32.totalorder %s32, 1
          %s337 = scalar_select %p336, %s32, 1
          %s338 = smul.addr %s337, 4
          %s339 = scalar_lea.vmem %s1, %s338
        $region16: #{tpu_custom_call.1} parent=11 // pred_fallthru
          _
        // Predicated region
        $region17: #{tpu_custom_call.1} parent=11 // pred_check
          %p340 = pneg %p143
        $region18: #{tpu_custom_call.1} parent=11 // pred_check_branch
          %342 = sbr.rel (%p340) target = $region20
        $region19: #{tpu_custom_call.1} parent=11 // pred_region
          %344 = vsyncadd [#allocation3], 0
          %s345 = smul.addr %s32, 16
          %s346 = smul.addr %s345, 8
          %s347 = scalar_lea.hbm %s3, %s346
          %s348 = sshll.u32 %s347, 4
          %s349 = int_to_ptr.hbm [resolvable:$true] %s348
          %s350 = sshll.u32 [#allocation2], 4
          %s351 = int_to_ptr.vmem [resolvable:$true] %s350
          %356 = dma.hbm_to_vmem [thread:$0]  %s349, 2048, %s351, [#allocation3], 128, 128, 8
        $region20: #{tpu_custom_call.1} parent=11 // pred_fallthru
          _
        // Predicated region
        $region21: #{tpu_custom_call.1} parent=11 // pred_check
          %p357 = pneg %p164
        $region22: #{tpu_custom_call.1} parent=11 // pred_check_branch
          %359 = sbr.rel (%p357) target = $region24
        $region23: #{tpu_custom_call.1} parent=11 // pred_region
          %361 = vsyncadd [#allocation6], 0
          %s362 = sshll.u32 %s4, 4
          %s363 = int_to_ptr.hbm [resolvable:$true] %s362
          %s364 = sshll.u32 [#allocation5], 4
          %s365 = int_to_ptr.vmem [resolvable:$true] %s364
          %370 = dma.hbm_to_vmem [thread:$0]  %s363, 2048, %s365, [#allocation6], 128, 128, 8
        $region24: #{tpu_custom_call.1} parent=11 // pred_fallthru
          _
        // Predicated region
        $region25: #{tpu_custom_call.1} parent=11 // pred_check
          %p371 = pneg %p185
        $region26: #{tpu_custom_call.1} parent=11 // pred_check_branch
          %373 = sbr.rel (%p371) target = $region28
        $region27: #{tpu_custom_call.1} parent=11 // pred_region
          %375 = vsyncadd [#allocation6], 0
          %s376 = sshll.u32 %s5, 4
          %s377 = int_to_ptr.hbm [resolvable:$true] %s376
          %s378 = sshll.u32 [#allocation7], 4
          %s379 = int_to_ptr.vmem [resolvable:$true] %s378
          %384 = dma.hbm_to_vmem [thread:$0]  %s377, 2048, %s379, [#allocation6], 128, 128, 8
        $region28: #{tpu_custom_call.1} parent=11 // pred_fallthru
          _
        // Predicated region
        $region29: #{tpu_custom_call.1} parent=11 // pred_check
          %p385 = pneg %p206
        $region30: #{tpu_custom_call.1} parent=11 // pred_check_branch
          %387 = sbr.rel (%p385) target = $region32
        $region31: #{tpu_custom_call.1} parent=11 // pred_region
          _
        $region32: #{tpu_custom_call.1} parent=11 // pred_fallthru
          _
        // Predicated region
        $region33: #{tpu_custom_call.1} parent=11 // pred_check
          %p388 = pneg %p227
        $region34: #{tpu_custom_call.1} parent=11 // pred_check_branch
          %390 = sbr.rel (%p388) target = $region36
        $region35: #{tpu_custom_call.1} parent=11 // pred_region
          _
        $region36: #{tpu_custom_call.1} parent=11 // pred_fallthru
          _
        // Predicated region
        $region37: #{tpu_custom_call.1} parent=11 // pred_check
          %p391 = pneg %p248
        $region38: #{tpu_custom_call.1} parent=11 // pred_check_branch
          %393 = sbr.rel (%p391) target = $region40
        $region39: #{tpu_custom_call.1} parent=11 // pred_region
          %395 = vsyncadd [#allocation9], 0
          %s396 = sshll.u32 %s8, 4
          %s397 = int_to_ptr.hbm [resolvable:$true] %s396
          %s398 = sshll.u32 [#allocation8], 4
          %s399 = int_to_ptr.vmem [resolvable:$true] %s398
          %404 = dma.hbm_to_vmem [thread:$0]  %s397, 2048, %s399, [#allocation9], 128, 128, 8
        $region40: #{tpu_custom_call.1} parent=11 // pred_fallthru
          _
        // Predicated region
        $region41: #{tpu_custom_call.1} parent=11 // pred_check
          %p405 = pneg %p269
        $region42: #{tpu_custom_call.1} parent=11 // pred_check_branch
          %407 = sbr.rel (%p405) target = $region44
        $region43: #{tpu_custom_call.1} parent=11 // pred_region
          _
        $region44: #{tpu_custom_call.1} parent=11 // pred_fallthru
          _
        // Predicated region
        $region45: #{tpu_custom_call.1} parent=11 // pred_check
          %p408 = pneg %p290
        $region46: #{tpu_custom_call.1} parent=11 // pred_check_branch
          %410 = sbr.rel (%p408) target = $region48
        $region47: #{tpu_custom_call.1} parent=11 // pred_region
          _
        $region48: #{tpu_custom_call.1} parent=11 // pred_fallthru
          _
      $region12: #{tpu_custom_call.1} parent=5 // pred_fallthru
        _
      %p411 = scmp.lt.s32.totalorder %s23, 2
      // Predicated region
      $region49: #{tpu_custom_call.1} parent=5 // pred_check
        %p412 = pneg %p411
      $region50: #{tpu_custom_call.1} parent=5 // pred_check_branch
        %414 = sbr.rel (%p412) target = $region52
      $region51: #{tpu_custom_call.1} parent=5 // pred_region
        // Predicated region
        $region53: #{tpu_custom_call.1} parent=51 // pred_check
          %p415 = pneg %p57
        $region54: #{tpu_custom_call.1} parent=51 // pred_check_branch
          %417 = sbr.rel (%p415) target = $region56
        $region55: #{tpu_custom_call.1} parent=51 // pred_region
          %s418 = smul.u32 2, %s31
          %p419 = scmp.lt.s32.totalorder %s30, 1
          %s420 = scalar_select %p419, %s30, 1
          %p421 = scmp.lt.s32.totalorder %s418, 1
          %s422 = scalar_select %p421, %s418, 1
          %s423 = smul.addr %s420, 2
          %s424 = sadd.s32 %s422, %s423
          %s425 = smul.addr %s424, 8
          %s426 = scalar_lea.vmem %s0, %s425
          %s427 = smul.u32 2, %s31
        $region56: #{tpu_custom_call.1} parent=51 // pred_fallthru
          _
        // Predicated region
        $region57: #{tpu_custom_call.1} parent=51 // pred_check
          %p428 = pneg %p111
        $region58: #{tpu_custom_call.1} parent=51 // pred_check_branch
          %430 = sbr.rel (%p428) target = $region60
        $region59: #{tpu_custom_call.1} parent=51 // pred_region
          %s431 = smul.u32 2, %s31
          %p432 = scmp.lt.s32.totalorder %s30, 1
          %s433 = scalar_select %p432, %s30, 1
          %p434 = scmp.lt.s32.totalorder %s431, 1
          %s435 = scalar_select %p434, %s431, 1
          %s436 = smul.addr %s433, 2
          %s437 = sadd.s32 %s435, %s436
          %s438 = smul.addr %s437, 8
          %s439 = scalar_lea.vmem %s2, %s438
          %s440 = smul.u32 2, %s31
        $region60: #{tpu_custom_call.1} parent=51 // pred_fallthru
          _
      $region52: #{tpu_custom_call.1} parent=5 // pred_fallthru
        _
      %p441 = scmp.le.s32.totalorder 1, %s23
      %p442 = scmp.lt.s32.totalorder %s23, 3
      %p443 = pnand %p441, %p442
      %p444 = pneg %p443
      // Predicated region
      $region61: #{tpu_custom_call.1} parent=5 // pred_check
        _
      $region62: #{tpu_custom_call.1} parent=5 // pred_check_branch
        %446 = sbr.rel (%p443) target = $region64
      $region63: #{tpu_custom_call.1} parent=5 // pred_region
        %s447 = ssub.s32 %s23, 1
        // Predicated region
        $region65: #{tpu_custom_call.1} parent=63 // pred_check
          %p448 = pneg %p143
        $region66: #{tpu_custom_call.1} parent=63 // pred_check_branch
          %450 = sbr.rel (%p448) target = $region68
        $region67: #{tpu_custom_call.1} parent=63 // pred_region
          %452 = dma.done [#allocation3], 2048
        $region68: #{tpu_custom_call.1} parent=63 // pred_fallthru
          _
        // Predicated region
        $region69: #{tpu_custom_call.1} parent=63 // pred_check
          %p453 = pneg %p164
        $region70: #{tpu_custom_call.1} parent=63 // pred_check_branch
          %455 = sbr.rel (%p453) target = $region72
        $region71: #{tpu_custom_call.1} parent=63 // pred_region
          %457 = dma.done [#allocation6], 2048
        $region72: #{tpu_custom_call.1} parent=63 // pred_fallthru
          _
        // Predicated region
        $region73: #{tpu_custom_call.1} parent=63 // pred_check
          %p458 = pneg %p185
        $region74: #{tpu_custom_call.1} parent=63 // pred_check_branch
          %460 = sbr.rel (%p458) target = $region76
        $region75: #{tpu_custom_call.1} parent=63 // pred_region
          %462 = dma.done [#allocation6], 2048
        $region76: #{tpu_custom_call.1} parent=63 // pred_fallthru
          _
        // Predicated region
        $region77: #{tpu_custom_call.1} parent=63 // pred_check
          %p463 = pneg %p248
        $region78: #{tpu_custom_call.1} parent=63 // pred_check_branch
          %465 = sbr.rel (%p463) target = $region80
        $region79: #{tpu_custom_call.1} parent=63 // pred_region
          %467 = dma.done [#allocation9], 2048
        $region80: #{tpu_custom_call.1} parent=63 // pred_fallthru
          _
        %s468 = smul.u32 2, %s33
        %p469 = scmp.lt.s32.totalorder %s32, 1
        %s470 = scalar_select %p469, %s32, 1
        %p471 = scmp.lt.s32.totalorder %s468, 1
        %s472 = scalar_select %p471, %s468, 1
        %s473 = smul.addr %s470, 2
        %s474 = sadd.s32 %s472, %s473
        %s475 = smul.addr %s474, 8
        %s476 = scalar_lea.vmem %s0, %s475
        %p477 = pneg %p63
        %p478 = pneg %p60
        %p479 = scmp.lt.s32.totalorder %s32, 1
        %s480 = scalar_select %p479, %s32, 1
        %s481 = smul.addr %s480, 4
        %s482 = scalar_lea.vmem %s1, %s481
        %p483 = pneg %p89
        %p484 = pneg %p86
        %s485 = smul.u32 2, %s33
        %p486 = scmp.lt.s32.totalorder %s32, 1
        %s487 = scalar_select %p486, %s32, 1
        %p488 = scmp.lt.s32.totalorder %s485, 1
        %s489 = scalar_select %p488, %s485, 1
        %s490 = smul.addr %s487, 2
        %s491 = sadd.s32 %s489, %s490
        %s492 = smul.addr %s491, 8
        %s493 = scalar_lea.vmem %s2, %s492
        %p494 = pneg %p117
        %p495 = pneg %p114
        %p496 = pneg %p143
        %p497 = pneg %p140
        %p498 = pneg %p164
        %p499 = pneg %p161
        %p500 = pneg %p185
        %p501 = pneg %p182
        %p502 = pneg %p206
        %p503 = pneg %p203
        %p504 = pneg %p227
        %p505 = pneg %p224
        %p506 = pneg %p248
        %p507 = pneg %p245
        %p508 = pneg %p269
        %p509 = pneg %p266
        %p510 = pneg %p290
        %p511 = pneg %p287
        %p512 = pneg %p318
        %p513 = pneg %p315
        %s514 = sand.u32 %s305, 1
        %s515 = scalar_lea.sflag [#allocation4], %s514
        %s516 = sand.u32 %s305, 1
        %s517 = smul.addr %s516, 16
        %s518 = scalar_lea.vmem [#allocation10], %s517
        %s519 = smul.u32 2, %s33
        %p520 = scmp.lt.s32.totalorder %s32, 1
        %s521 = scalar_select %p520, %s32, 1
        %p522 = scmp.lt.s32.totalorder %s519, 1
        %s523 = scalar_select %p522, %s519, 1
        %s524 = smul.addr %s521, 2
        %s525 = sadd.s32 %s523, %s524
        %s526 = smul.addr %s525, 8
        %s527 = scalar_lea.vmem %s0, %s526
        %s528 = smul.u32 2, %s33
        %p529 = scmp.lt.s32.totalorder %s32, 1
        %s530 = scalar_select %p529, %s32, 1
        %s531 = smul.addr %s530, 4
        %s532 = scalar_lea.vmem %s1, %s531
        %s533 = smul.u32 2, %s33
        %p534 = scmp.lt.s32.totalorder %s32, 1
        %s535 = scalar_select %p534, %s32, 1
        %p536 = scmp.lt.s32.totalorder %s533, 1
        %s537 = scalar_select %p536, %s533, 1
        %s538 = smul.addr %s535, 2
        %s539 = sadd.s32 %s537, %s538
        %s540 = smul.addr %s539, 8
        %s541 = scalar_lea.vmem %s2, %s540
        %s542 = smul.u32 2, %s33
        %s543 = smul.u32 2, %s33
        %v544 = vld [vmem:[%s527] sm:$0xff]
        %v545 = vld [vmem:[%s527 + $0x8] sm:$0xff]
        %v546 = vld [vmem:[%s532] sm:$0x7]
        %v547 = vld [vmem:[%s541] sm:$0xff]
        %v548 = vld [vmem:[%s541 + $0x8] sm:$0xff]
        %v549 = vld [vmem:[#allocation2] sm:$0xff]
        %v550 = vld [vmem:[#allocation2 + $0x8] sm:$0xff]
        %v551 = vld [vmem:[#allocation2 + $0x10] sm:$0xff]
        %v552 = vld [vmem:[#allocation2 + $0x18] sm:$0xff]
        %v553 = vld [vmem:[#allocation2 + $0x20] sm:$0xff]
        %v554 = vld [vmem:[#allocation2 + $0x28] sm:$0xff]
        %v555 = vld [vmem:[#allocation2 + $0x30] sm:$0xff]
        %v556 = vld [vmem:[#allocation2 + $0x38] sm:$0xff]
        %v557 = vld [vmem:[#allocation2 + $0x40] sm:$0xff]
        %v558 = vld [vmem:[#allocation2 + $0x48] sm:$0xff]
        %v559 = vld [vmem:[#allocation2 + $0x50] sm:$0xff]
        %v560 = vld [vmem:[#allocation2 + $0x58] sm:$0xff]
        %v561 = vld [vmem:[#allocation2 + $0x60] sm:$0xff]
        %v562 = vld [vmem:[#allocation2 + $0x68] sm:$0xff]
        %v563 = vld [vmem:[#allocation2 + $0x70] sm:$0xff]
        %v564 = vld [vmem:[#allocation2 + $0x78] sm:$0xff]
        %566 = vset.pattern.permute.xlu0 0
        %567 = vperm.xlu0 %566, %v544
        %v568 = vpop.permute.xlu0 %567
        %571 = vset.pattern.permute.xlu0 0
        %572 = vperm.xlu0 %571, %v545
        %v573 = vpop.permute.xlu0 %572
        %v575 = vperm.slane %v546, 0
        %v576 = vsub.f32 %v568, %v575
        %v577 = vsub.f32 %v573, %v575
        %v578 = vmul.f32 %v576, %v576
        %v579 = vmul.f32 %v577, %v577
        %580 = vset.pattern.permute.xlu0 1
        %581 = vperm.xlu0 %580, %v544
        %v582 = vpop.permute.xlu0 %581
        %584 = vset.pattern.permute.xlu0 1
        %585 = vperm.xlu0 %584, %v545
        %v586 = vpop.permute.xlu0 %585
        %v588 = vperm.slane %v546, 1
        %v589 = vsub.f32 %v582, %v588
        %v590 = vsub.f32 %v586, %v588
        %v591 = vmul.f32 %v589, %v589
        %v592 = vmul.f32 %v590, %v590
        %v593 = vadd.f32 %v578, %v591
        %v594 = vadd.f32 %v579, %v592
        %595 = vset.pattern.permute.xlu0 2
        %596 = vperm.xlu0 %595, %v544
        %v597 = vpop.permute.xlu0 %596
        %599 = vset.pattern.permute.xlu0 2
        %600 = vperm.xlu0 %599, %v545
        %v601 = vpop.permute.xlu0 %600
        %v603 = vperm.slane %v546, 2
        %v604 = vsub.f32 %v597, %v603
        %v605 = vsub.f32 %v601, %v603
        %v606 = vmul.f32 %v604, %v604
        %v607 = vmul.f32 %v605, %v605
        %v608 = vadd.f32 %v593, %v606
        %v609 = vadd.f32 %v594, %v607
        %v610 = vlaneseq
        %v611 = vand.u32 %v610, 127
        %v614 = vand.u32 %v608, 4294967168
        %v615 = vand.u32 %v609, 4294967168
        %v616 = vor.u32 %v614, %v611
        %v617 = vor.u32 %v615, %v611
        %v618 = vand.u32 %v616, 65535
        %v619 = vshra.s32 %v616, 16
        %v620 = vcvt.s32.f32 %v618
        %v621 = vcvt.s32.f32 %v619
        %622 = vmin.xlane.f32.xlu0 %v621
        %v623 = vpop.xlane.xlu0 %622
        %vm624 = vcmp.eq.f32.partialorder %v621, %v623
        %v625 = vsel %vm624, %v620, inf
        %626 = vmin.xlane.f32.xlu0 %v625
        %v627 = vpop.xlane.xlu0 %626
        %v628 = vcvt.f32.s32 %v627
        %v629 = vcvt.f32.s32 %v623
        %v630 = vshll.u32 %v629, 16
        %v631 = vadd.s32 %v630, %v628
        %v632 = vand.u32 %v617, 65535
        %v633 = vshra.s32 %v617, 16
        %v634 = vcvt.s32.f32 %v632
        %v635 = vcvt.s32.f32 %v633
        %636 = vmin.xlane.f32.xlu0 %v635
        %v637 = vpop.xlane.xlu0 %636
        %vm638 = vcmp.eq.f32.partialorder %v635, %v637
        %v639 = vsel %vm638, %v634, inf
        %640 = vmin.xlane.f32.xlu0 %v639
        %v641 = vpop.xlane.xlu0 %640
        %v642 = vcvt.f32.s32 %v641
        %v643 = vcvt.f32.s32 %v637
        %v644 = vshll.u32 %v643, 16
        %v645 = vadd.s32 %v644, %v642
        %v646 = vand.u32 %v631, 4294967168
        %v647 = vand.u32 %v645, 4294967168
        %v650 = vrsqrt.pop %v646
        %v651 = vmul.f32 %v650, %v646
        %v652 = vmul.f32 %v651, %v650
        %v653 = vmul.f32 0.5, %v652
        %v654 = vsub.f32 1.5, %v653
        %v655 = vmul.f32 %v650, %v654
        %v656 = vmul.f32 %v646, %v655
        %vm657 = vcmp.eq.f32.partialorder %v646, inf
        %v658 = vsel %vm657, %v646, %v656
        %vm659 = vcmp.eq.f32.partialorder %v646, 0.0
        %v660 = vand.u32 %v646, 2147483648
        %v661 = vsel %vm659, %v660, %v658
        %v662 = vrsqrt.pop %v647
        %v663 = vmul.f32 %v662, %v647
        %v664 = vmul.f32 %v663, %v662
        %v665 = vmul.f32 0.5, %v664
        %v666 = vsub.f32 1.5, %v665
        %v667 = vmul.f32 %v662, %v666
        %v668 = vmul.f32 %v647, %v667
        %vm669 = vcmp.eq.f32.partialorder %v647, inf
        %v670 = vsel %vm669, %v647, %v668
        %vm671 = vcmp.eq.f32.partialorder %v647, 0.0
        %v672 = vand.u32 %v647, 2147483648
        %v673 = vsel %vm671, %v672, %v670
        %v674 = vadd.f32 %v661, 1e-08
        %v675 = vadd.f32 %v673, 1e-08
        %v676 = vrcp.pop %v674
        %v677 = vmul.f32 %v674, %v676
        %v678 = vsub.f32 1.0, %v677
        %v679 = vmul.f32 %v676, %v678
        %v680 = vadd.f32 %v676, %v679
        %vm681 = vweird.f32 %v674
        %vm682 = vweird.f32 %v676
        %vm683 = vmor %vm681, %vm682
        %v684 = vsel %vm683, %v676, %v680
        %v685 = vand.u32 2147483647, %v674
        %vm686 = vcmp.eq.f32.partialorder %v685, 8.507059e+37
        %v687 = vand.u32 %v674, 2147483648
        %v688 = vor.u32 1.1754944e-38, %v687
        %v689 = vsel %vm686, %v688, %v684
        %v690 = vmul.f32 1.0, %v689
        %v691 = vrcp.pop %v675
        %v692 = vmul.f32 %v675, %v691
        %v693 = vsub.f32 1.0, %v692
        %v694 = vmul.f32 %v691, %v693
        %v695 = vadd.f32 %v691, %v694
        %vm696 = vweird.f32 %v675
        %vm697 = vweird.f32 %v691
        %vm698 = vmor %vm696, %vm697
        %v699 = vsel %vm698, %v691, %v695
        %v700 = vand.u32 2147483647, %v675
        %vm701 = vcmp.eq.f32.partialorder %v700, 8.507059e+37
        %v702 = vand.u32 %v675, 2147483648
        %v703 = vor.u32 1.1754944e-38, %v702
        %v704 = vsel %vm701, %v703, %v699
        %v705 = vmul.f32 1.0, %v704
        %vm706 = vcmp.eq.s32.totalorder %v616, %v631
        %vm707 = vcmp.eq.s32.totalorder %v617, %v645
        %v708 = vsel %vm706, %v690, 0.0
        %v709 = vsel %vm707, %v705, 0.0
        %v710 = vadd.f32 %v690, 0.0
        %v711 = vadd.f32 %v705, 0.0
        %v712 = vsel %vm706, 2147483647, %v616
        %v713 = vsel %vm707, 2147483647, %v617
        %v714 = vand.u32 %v712, 65535
        %v715 = vshra.s32 %v712, 16
        %v716 = vcvt.s32.f32 %v714
        %v717 = vcvt.s32.f32 %v715
        %718 = vmin.xlane.f32.xlu0 %v717
        %v719 = vpop.xlane.xlu0 %718
        %vm720 = vcmp.eq.f32.partialorder %v717, %v719
        %v721 = vsel %vm720, %v716, inf
        %722 = vmin.xlane.f32.xlu0 %v721
        %v723 = vpop.xlane.xlu0 %722
        %v724 = vcvt.f32.s32 %v723
        %v725 = vcvt.f32.s32 %v719
        %v726 = vshll.u32 %v725, 16
        %v727 = vadd.s32 %v726, %v724
        %v728 = vand.u32 %v713, 65535
        %v729 = vshra.s32 %v713, 16
        %v730 = vcvt.s32.f32 %v728
        %v731 = vcvt.s32.f32 %v729
        %732 = vmin.xlane.f32.xlu0 %v731
        %v733 = vpop.xlane.xlu0 %732
        %vm734 = vcmp.eq.f32.partialorder %v731, %v733
        %v735 = vsel %vm734, %v730, inf
        %736 = vmin.xlane.f32.xlu0 %v735
        %v737 = vpop.xlane.xlu0 %736
        %v738 = vcvt.f32.s32 %v737
        %v739 = vcvt.f32.s32 %v733
        %v740 = vshll.u32 %v739, 16
        %v741 = vadd.s32 %v740, %v738
        %v742 = vand.u32 %v727, 4294967168
        %v743 = vand.u32 %v741, 4294967168
        %v746 = vrsqrt.pop %v742
        %v747 = vmul.f32 %v746, %v742
        %v748 = vmul.f32 %v747, %v746
        %v749 = vmul.f32 0.5, %v748
        %v750 = vsub.f32 1.5, %v749
        %v751 = vmul.f32 %v746, %v750
        %v752 = vmul.f32 %v742, %v751
        %vm753 = vcmp.eq.f32.partialorder %v742, inf
        %v754 = vsel %vm753, %v742, %v752
        %vm755 = vcmp.eq.f32.partialorder %v742, 0.0
        %v756 = vand.u32 %v742, 2147483648
        %v757 = vsel %vm755, %v756, %v754
        %v758 = vrsqrt.pop %v743
        %v759 = vmul.f32 %v758, %v743
        %v760 = vmul.f32 %v759, %v758
        %v761 = vmul.f32 0.5, %v760
        %v762 = vsub.f32 1.5, %v761
        %v763 = vmul.f32 %v758, %v762
        %v764 = vmul.f32 %v743, %v763
        %vm765 = vcmp.eq.f32.partialorder %v743, inf
        %v766 = vsel %vm765, %v743, %v764
        %vm767 = vcmp.eq.f32.partialorder %v743, 0.0
        %v768 = vand.u32 %v743, 2147483648
        %v769 = vsel %vm767, %v768, %v766
        %v770 = vadd.f32 %v757, 1e-08
        %v771 = vadd.f32 %v769, 1e-08
        %v772 = vrcp.pop %v770
        %v773 = vmul.f32 %v770, %v772
        %v774 = vsub.f32 1.0, %v773
        %v775 = vmul.f32 %v772, %v774
        %v776 = vadd.f32 %v772, %v775
        %vm777 = vweird.f32 %v770
        %vm778 = vweird.f32 %v772
        %vm779 = vmor %vm777, %vm778
        %v780 = vsel %vm779, %v772, %v776
        %v781 = vand.u32 2147483647, %v770
        %vm782 = vcmp.eq.f32.partialorder %v781, 8.507059e+37
        %v783 = vand.u32 %v770, 2147483648
        %v784 = vor.u32 1.1754944e-38, %v783
        %v785 = vsel %vm782, %v784, %v780
        %v786 = vmul.f32 1.0, %v785
        %v787 = vrcp.pop %v771
        %v788 = vmul.f32 %v771, %v787
        %v789 = vsub.f32 1.0, %v788
        %v790 = vmul.f32 %v787, %v789
        %v791 = vadd.f32 %v787, %v790
        %vm792 = vweird.f32 %v771
        %vm793 = vweird.f32 %v787
        %vm794 = vmor %vm792, %vm793
        %v795 = vsel %vm794, %v787, %v791
        %v796 = vand.u32 2147483647, %v771
        %vm797 = vcmp.eq.f32.partialorder %v796, 8.507059e+37
        %v798 = vand.u32 %v771, 2147483648
        %v799 = vor.u32 1.1754944e-38, %v798
        %v800 = vsel %vm797, %v799, %v795
        %v801 = vmul.f32 1.0, %v800
        %vm802 = vcmp.eq.s32.totalorder %v712, %v727
        %vm803 = vcmp.eq.s32.totalorder %v713, %v741
        %v804 = vsel %vm802, %v786, %v708
        %v805 = vsel %vm803, %v801, %v709
        %v806 = vadd.f32 %v710, %v786
        %v807 = vadd.f32 %v711, %v801
        %v808 = vsel %vm802, 2147483647, %v712
        %v809 = vsel %vm803, 2147483647, %v713
        %v810 = vand.u32 %v808, 65535
        %v811 = vshra.s32 %v808, 16
        %v812 = vcvt.s32.f32 %v810
        %v813 = vcvt.s32.f32 %v811
        %814 = vmin.xlane.f32.xlu0 %v813
        %v815 = vpop.xlane.xlu0 %814
        %vm816 = vcmp.eq.f32.partialorder %v813, %v815
        %v817 = vsel %vm816, %v812, inf
        %818 = vmin.xlane.f32.xlu0 %v817
        %v819 = vpop.xlane.xlu0 %818
        %v820 = vcvt.f32.s32 %v819
        %v821 = vcvt.f32.s32 %v815
        %v822 = vshll.u32 %v821, 16
        %v823 = vadd.s32 %v822, %v820
        %v824 = vand.u32 %v809, 65535
        %v825 = vshra.s32 %v809, 16
        %v826 = vcvt.s32.f32 %v824
        %v827 = vcvt.s32.f32 %v825
        %828 = vmin.xlane.f32.xlu0 %v827
        %v829 = vpop.xlane.xlu0 %828
        %vm830 = vcmp.eq.f32.partialorder %v827, %v829
        %v831 = vsel %vm830, %v826, inf
        %832 = vmin.xlane.f32.xlu0 %v831
        %v833 = vpop.xlane.xlu0 %832
        %v834 = vcvt.f32.s32 %v833
        %v835 = vcvt.f32.s32 %v829
        %v836 = vshll.u32 %v835, 16
        %v837 = vadd.s32 %v836, %v834
        %v838 = vand.u32 %v823, 4294967168
        %v839 = vand.u32 %v837, 4294967168
        %v842 = vrsqrt.pop %v838
        %v843 = vmul.f32 %v842, %v838
        %v844 = vmul.f32 %v843, %v842
        %v845 = vmul.f32 0.5, %v844
        %v846 = vsub.f32 1.5, %v845
        %v847 = vmul.f32 %v842, %v846
        %v848 = vmul.f32 %v838, %v847
        %vm849 = vcmp.eq.f32.partialorder %v838, inf
        %v850 = vsel %vm849, %v838, %v848
        %vm851 = vcmp.eq.f32.partialorder %v838, 0.0
        %v852 = vand.u32 %v838, 2147483648
        %v853 = vsel %vm851, %v852, %v850
        %v854 = vrsqrt.pop %v839
        %v855 = vmul.f32 %v854, %v839
        %v856 = vmul.f32 %v855, %v854
        %v857 = vmul.f32 0.5, %v856
        %v858 = vsub.f32 1.5, %v857
        %v859 = vmul.f32 %v854, %v858
        %v860 = vmul.f32 %v839, %v859
        %vm861 = vcmp.eq.f32.partialorder %v839, inf
        %v862 = vsel %vm861, %v839, %v860
        %vm863 = vcmp.eq.f32.partialorder %v839, 0.0
        %v864 = vand.u32 %v839, 2147483648
        %v865 = vsel %vm863, %v864, %v862
        %v866 = vadd.f32 %v853, 1e-08
        %v867 = vadd.f32 %v865, 1e-08
        %v868 = vrcp.pop %v866
        %v869 = vmul.f32 %v866, %v868
        %v870 = vsub.f32 1.0, %v869
        %v871 = vmul.f32 %v868, %v870
        %v872 = vadd.f32 %v868, %v871
        %vm873 = vweird.f32 %v866
        %vm874 = vweird.f32 %v868
        %vm875 = vmor %vm873, %vm874
        %v876 = vsel %vm875, %v868, %v872
        %v877 = vand.u32 2147483647, %v866
        %vm878 = vcmp.eq.f32.partialorder %v877, 8.507059e+37
        %v879 = vand.u32 %v866, 2147483648
        %v880 = vor.u32 1.1754944e-38, %v879
        %v881 = vsel %vm878, %v880, %v876
        %v882 = vmul.f32 1.0, %v881
        %v883 = vrcp.pop %v867
        %v884 = vmul.f32 %v867, %v883
        %v885 = vsub.f32 1.0, %v884
        %v886 = vmul.f32 %v883, %v885
        %v887 = vadd.f32 %v883, %v886
        %vm888 = vweird.f32 %v867
        %vm889 = vweird.f32 %v883
        %vm890 = vmor %vm888, %vm889
        %v891 = vsel %vm890, %v883, %v887
        %v892 = vand.u32 2147483647, %v867
        %vm893 = vcmp.eq.f32.partialorder %v892, 8.507059e+37
        %v894 = vand.u32 %v867, 2147483648
        %v895 = vor.u32 1.1754944e-38, %v894
        %v896 = vsel %vm893, %v895, %v891
        %v897 = vmul.f32 1.0, %v896
        %vm898 = vcmp.eq.s32.totalorder %v808, %v823
        %vm899 = vcmp.eq.s32.totalorder %v809, %v837
        %v900 = vsel %vm898, %v882, %v804
        %v901 = vsel %vm899, %v897, %v805
        %v902 = vadd.f32 %v806, %v882
        %v903 = vadd.f32 %v807, %v897
        %v904 = vrcp.pop %v902
        %v905 = vmul.f32 %v902, %v904
        %v906 = vsub.f32 1.0, %v905
        %v907 = vmul.f32 %v904, %v906
        %v908 = vadd.f32 %v904, %v907
        %vm909 = vweird.f32 %v902
        %vm910 = vweird.f32 %v904
        %vm911 = vmor %vm909, %vm910
        %v912 = vsel %vm911, %v904, %v908
        %v913 = vand.u32 2147483647, %v902
        %vm914 = vcmp.eq.f32.partialorder %v913, 8.507059e+37
        %v915 = vand.u32 %v902, 2147483648
        %v916 = vor.u32 1.1754944e-38, %v915
        %v917 = vsel %vm914, %v916, %v912
        %v918 = vmul.f32 1.0, %v917
        %v919 = vrcp.pop %v903
        %v920 = vmul.f32 %v903, %v919
        %v921 = vsub.f32 1.0, %v920
        %v922 = vmul.f32 %v919, %v921
        %v923 = vadd.f32 %v919, %v922
        %vm924 = vweird.f32 %v903
        %vm925 = vweird.f32 %v919
        %vm926 = vmor %vm924, %vm925
        %v927 = vsel %vm926, %v919, %v923
        %v928 = vand.u32 2147483647, %v903
        %vm929 = vcmp.eq.f32.partialorder %v928, 8.507059e+37
        %v930 = vand.u32 %v903, 2147483648
        %v931 = vor.u32 1.1754944e-38, %v930
        %v932 = vsel %vm929, %v931, %v927
        %v933 = vmul.f32 1.0, %v932
        %934 = vmatpush.msra.mxu0 %v564
        %935 = vmatpush.msra.mxu0 %v563
        %936 = vmatpush.msra.mxu0 %v562
        %937 = vmatpush.msra.mxu0 %v561
        %938 = vmatpush.msra.mxu0 %v560
        %939 = vmatpush.msra.mxu0 %v559
        %940 = vmatpush.msra.mxu0 %v558
        %941 = vmatpush.msra.mxu0 %v557
        %942 = vmatpush.msra.mxu0 %v556
        %943 = vmatpush.msra.mxu0 %v555
        %944 = vmatpush.msra.mxu0 %v554
        %945 = vmatpush.msra.mxu0 %v553
        %946 = vmatpush.msra.mxu0 %v552
        %947 = vmatpush.msra.mxu0 %v551
        %948 = vmatpush.msra.mxu0 %v550
        %949 = vmatpush.msra.mxu0 %v549
        %950 = vmatmul.f32.gmra.mxu0 %v900
        %v951 = vpop.f32.mrf.mxu0
        %v952 = vadd.f32 0.0, %v951
        %953 = vmatmul.f32.gmra.mxu0 %v901
        %v954 = vpop.f32.mrf.mxu0
        %v955 = vadd.f32 0.0, %v954
        %956 = vdwg.mxu0
        %v957 = vmul.f32 %v952, %v918
        %v958 = vmul.f32 %v955, %v933
        %v959 = vld [vmem:[#allocation5] sm:$0xff]
        %v960 = vld [vmem:[#allocation5 + $0x8] sm:$0xff]
        %v961 = vld [vmem:[#allocation5 + $0x10] sm:$0xff]
        %v962 = vld [vmem:[#allocation5 + $0x18] sm:$0xff]
        %v963 = vld [vmem:[#allocation5 + $0x20] sm:$0xff]
        %v964 = vld [vmem:[#allocation5 + $0x28] sm:$0xff]
        %v965 = vld [vmem:[#allocation5 + $0x30] sm:$0xff]
        %v966 = vld [vmem:[#allocation5 + $0x38] sm:$0xff]
        %v967 = vld [vmem:[#allocation5 + $0x40] sm:$0xff]
        %v968 = vld [vmem:[#allocation5 + $0x48] sm:$0xff]
        %v969 = vld [vmem:[#allocation5 + $0x50] sm:$0xff]
        %v970 = vld [vmem:[#allocation5 + $0x58] sm:$0xff]
        %v971 = vld [vmem:[#allocation5 + $0x60] sm:$0xff]
        %v972 = vld [vmem:[#allocation5 + $0x68] sm:$0xff]
        %v973 = vld [vmem:[#allocation5 + $0x70] sm:$0xff]
        %v974 = vld [vmem:[#allocation5 + $0x78] sm:$0xff]
        %v975 = vld [vmem:[#allocation7] sm:$0xff]
        %v976 = vld [vmem:[#allocation7 + $0x8] sm:$0xff]
        %v977 = vld [vmem:[#allocation7 + $0x10] sm:$0xff]
        %v978 = vld [vmem:[#allocation7 + $0x18] sm:$0xff]
        %v979 = vld [vmem:[#allocation7 + $0x20] sm:$0xff]
        %v980 = vld [vmem:[#allocation7 + $0x28] sm:$0xff]
        %v981 = vld [vmem:[#allocation7 + $0x30] sm:$0xff]
        %v982 = vld [vmem:[#allocation7 + $0x38] sm:$0xff]
        %v983 = vld [vmem:[#allocation7 + $0x40] sm:$0xff]
        %v984 = vld [vmem:[#allocation7 + $0x48] sm:$0xff]
        %v985 = vld [vmem:[#allocation7 + $0x50] sm:$0xff]
        %v986 = vld [vmem:[#allocation7 + $0x58] sm:$0xff]
        %v987 = vld [vmem:[#allocation7 + $0x60] sm:$0xff]
        %v988 = vld [vmem:[#allocation7 + $0x68] sm:$0xff]
        %v989 = vld [vmem:[#allocation7 + $0x70] sm:$0xff]
        %v990 = vld [vmem:[#allocation7 + $0x78] sm:$0xff]
        %991 = vmatpush.msra.mxu0 %v990
        %992 = vmatpush.msra.mxu0 %v989
        %993 = vmatpush.msra.mxu0 %v988
        %994 = vmatpush.msra.mxu0 %v987
        %995 = vmatpush.msra.mxu0 %v986
        %996 = vmatpush.msra.mxu0 %v985
        %997 = vmatpush.msra.mxu0 %v984
        %998 = vmatpush.msra.mxu0 %v983
        %999 = vmatpush.msra.mxu0 %v982
        %1000 = vmatpush.msra.mxu0 %v981
        %1001 = vmatpush.msra.mxu0 %v980
        %1002 = vmatpush.msra.mxu0 %v979
        %1003 = vmatpush.msra.mxu0 %v978
        %1004 = vmatpush.msra.mxu0 %v977
        %1005 = vmatpush.msra.mxu0 %v976
        %1006 = vmatpush.msra.mxu0 %v975
        %1007 = vmatmul.f32.gmra.mxu0 %v547
        %v1008 = vpop.f32.mrf.mxu0
        %v1009 = vadd.f32 0.0, %v1008
        %1010 = vmatmul.f32.gmra.mxu0 %v548
        %v1011 = vpop.f32.mrf.mxu0
        %v1012 = vadd.f32 0.0, %v1011
        %1013 = vdwg.mxu0
        %1014 = vmatpush.msra.mxu0 %v974
        %1015 = vmatpush.msra.mxu0 %v973
        %1016 = vmatpush.msra.mxu0 %v972
        %1017 = vmatpush.msra.mxu0 %v971
        %1018 = vmatpush.msra.mxu0 %v970
        %1019 = vmatpush.msra.mxu0 %v969
        %1020 = vmatpush.msra.mxu0 %v968
        %1021 = vmatpush.msra.mxu0 %v967
        %1022 = vmatpush.msra.mxu0 %v966
        %1023 = vmatpush.msra.mxu0 %v965
        %1024 = vmatpush.msra.mxu0 %v964
        %1025 = vmatpush.msra.mxu0 %v963
        %1026 = vmatpush.msra.mxu0 %v962
        %1027 = vmatpush.msra.mxu0 %v961
        %1028 = vmatpush.msra.mxu0 %v960
        %1029 = vmatpush.msra.mxu0 %v959
        %1030 = vmatmul.f32.gmra.mxu0 %v957
        %v1031 = vpop.f32.mrf.mxu0
        %v1032 = vadd.f32 %v1009, %v1031
        %1033 = vmatmul.f32.gmra.mxu0 %v958
        %v1034 = vpop.f32.mrf.mxu0
        %v1035 = vadd.f32 %v1012, %v1034
        %1036 = vdwg.mxu0
        %v1037 = vld [vmem:[%s6] sm:$0x1]
        %v1039 = vperm.slane %v1037, 0
        %v1041 = vmul.f32 %v1032, %v1039
        %v1042 = vmul.f32 %v1035, %v1039
        %v1043 = vld [vmem:[%s7] sm:$0x1]
        %v1045 = vperm.slane %v1043, 0
        %v1047 = vadd.f32 %v1041, %v1045
        %v1048 = vadd.f32 %v1042, %v1045
        %v1049 = vmax.f32 %v1047, 0.0
        %v1050 = vmax.f32 %v1048, 0.0
        %v1051 = vld [vmem:[#allocation8] sm:$0xff]
        %v1052 = vld [vmem:[#allocation8 + $0x8] sm:$0xff]
        %v1053 = vld [vmem:[#allocation8 + $0x10] sm:$0xff]
        %v1054 = vld [vmem:[#allocation8 + $0x18] sm:$0xff]
        %v1055 = vld [vmem:[#allocation8 + $0x20] sm:$0xff]
        %v1056 = vld [vmem:[#allocation8 + $0x28] sm:$0xff]
        %v1057 = vld [vmem:[#allocation8 + $0x30] sm:$0xff]
        %v1058 = vld [vmem:[#allocation8 + $0x38] sm:$0xff]
        %v1059 = vld [vmem:[#allocation8 + $0x40] sm:$0xff]
        %v1060 = vld [vmem:[#allocation8 + $0x48] sm:$0xff]
        %v1061 = vld [vmem:[#allocation8 + $0x50] sm:$0xff]
        %v1062 = vld [vmem:[#allocation8 + $0x58] sm:$0xff]
        %v1063 = vld [vmem:[#allocation8 + $0x60] sm:$0xff]
        %v1064 = vld [vmem:[#allocation8 + $0x68] sm:$0xff]
        %v1065 = vld [vmem:[#allocation8 + $0x70] sm:$0xff]
        %v1066 = vld [vmem:[#allocation8 + $0x78] sm:$0xff]
        %1067 = vmatpush.msra.mxu0 %v1066
        %1068 = vmatpush.msra.mxu0 %v1065
        %1069 = vmatpush.msra.mxu0 %v1064
        %1070 = vmatpush.msra.mxu0 %v1063
        %1071 = vmatpush.msra.mxu0 %v1062
        %1072 = vmatpush.msra.mxu0 %v1061
        %1073 = vmatpush.msra.mxu0 %v1060
        %1074 = vmatpush.msra.mxu0 %v1059
        %1075 = vmatpush.msra.mxu0 %v1058
        %1076 = vmatpush.msra.mxu0 %v1057
        %1077 = vmatpush.msra.mxu0 %v1056
        %1078 = vmatpush.msra.mxu0 %v1055
        %1079 = vmatpush.msra.mxu0 %v1054
        %1080 = vmatpush.msra.mxu0 %v1053
        %1081 = vmatpush.msra.mxu0 %v1052
        %1082 = vmatpush.msra.mxu0 %v1051
        %1083 = vmatmul.f32.gmra.mxu0 %v1049
        %v1084 = vpop.f32.mrf.mxu0
        %v1085 = vadd.f32 0.0, %v1084
        %1086 = vmatmul.f32.gmra.mxu0 %v1050
        %v1087 = vpop.f32.mrf.mxu0
        %v1088 = vadd.f32 0.0, %v1087
        %1089 = vdwg.mxu0
        %v1090 = vld [vmem:[%s9] sm:$0x1]
        %v1092 = vperm.slane %v1090, 0
        %v1094 = vmul.f32 %v1085, %v1092
        %v1095 = vmul.f32 %v1088, %v1092
        %v1096 = vld [vmem:[%s10] sm:$0x1]
        %v1098 = vperm.slane %v1096, 0
        %v1100 = vadd.f32 %v1094, %v1098
        %v1101 = vadd.f32 %v1095, %v1098
        %v1102 = vmax.f32 %v1100, 0.0
        %v1103 = vmax.f32 %v1101, 0.0
        %1104 = vst [vmem:[%s518] sm:$0xff] %v1102
        %1105 = vst [vmem:[%s518 + $0x8] sm:$0xff] %v1103
        %s1106 = sand.u32 %s305, 1
        %s1107 = scalar_lea.sflag [#allocation4], %s1106
        %s1108 = sand.u32 %s305, 1
        %s1109 = smul.addr %s1108, 16
        %s1110 = scalar_lea.vmem [#allocation10], %s1109
        // Predicated region
        $region81: #{tpu_custom_call.1} parent=63 // pred_check
          %p1111 = pneg %p315
        $region82: #{tpu_custom_call.1} parent=63 // pred_check_branch
          %1113 = sbr.rel (%p1111) target = $region84
        $region83: #{tpu_custom_call.1} parent=63 // pred_region
          %s1114 = smul.u32 2, %s33
          %1116 = vsyncadd %s1107, 0
          %s1117 = smul.addr %s32, 2
          %s1118 = sadd.s32 %s1114, %s1117
          %s1119 = smul.addr %s1118, 8
          %s1120 = scalar_lea.hbm %s11, %s1119
          %s1121 = sshll.u32 %s1110, 4
          %s1122 = int_to_ptr.vmem [resolvable:$true] %s1121
          %s1123 = sshll.u32 %s1120, 4
          %s1124 = int_to_ptr.hbm [resolvable:$true] %s1123
          %1129 = dma.vmem_to_hbm [thread:$0]  %s1122, 256, %s1124, %s1107, 128, 128, 8
        $region84: #{tpu_custom_call.1} parent=63 // pred_fallthru
          _
      $region64: #{tpu_custom_call.1} parent=5 // pred_fallthru
        _
      %p1130 = scmp.le.s32.totalorder 2, %s23
      // Predicated region
      $region85: #{tpu_custom_call.1} parent=5 // pred_check
        %p1131 = pneg %p1130
      $region86: #{tpu_custom_call.1} parent=5 // pred_check_branch
        %1133 = sbr.rel (%p1131) target = $region88
      $region87: #{tpu_custom_call.1} parent=5 // pred_region
        %s1134 = ssub.s32 %s23, 2
        // Predicated region
        $region89: #{tpu_custom_call.1} parent=87 // pred_check
          %p1135 = pneg %p321
        $region90: #{tpu_custom_call.1} parent=87 // pred_check_branch
          %1137 = sbr.rel (%p1135) target = $region92
        $region91: #{tpu_custom_call.1} parent=87 // pred_region
          %s1138 = sand.u32 %s306, 1
          %s1139 = scalar_lea.sflag [#allocation4], %s1138
          %s1140 = sand.u32 %s306, 1
          %s1141 = smul.addr %s1140, 16
          %s1142 = scalar_lea.vmem [#allocation10], %s1141
          %1144 = dma.done %s1139, 256
        $region92: #{tpu_custom_call.1} parent=87 // pred_fallthru
          _
      $region88: #{tpu_custom_call.1} parent=5 // pred_fallthru
        _
    $region6: #{tpu_custom_call.1} parent=1 // loop_footer
      %s27 = sadd.s32 1, %s23
    $region7: #{tpu_custom_call.1} parent=1 // loop_footer_branch
      %22 = sbr.rel target = $region3
    $region8: #{tpu_custom_call.1} parent=1 // loop_exit
      _
    %1145 = vsyncpa [#allocation3], 1
    %s1146 = scalar_lea.sflag [#allocation3], 1
    %1147 = vsyncpa %s1146, 1
    %1148 = vsyncpa [#allocation6], 1
    %1149 = vsyncpa [#allocation9], 1
    %1150 = vsyncpa [#allocation4], 1
    %s1151 = scalar_lea.sflag [#allocation4], 1
    %1152 = vsyncpa %s1151, 1

// kernel: tpu_custom_call.1
$region0: #{tpu_custom_call.1}
  #allocation0 [shape = 'u32[]', space=smem, size = 0x4, offset = 0x4, fixed_abs, tag = 'smem constant byte address 0x4 - core index']
  #allocation1 [shape = 'u32[72,128]{1,0:T(1,128)}', space=vmem, size = 0x9000, scoped, tag = 'internal scratch']
  %s0 = inlined_call_operand.vmem [shape: f32[2,16,3], index: 0, kind: input, shape index: {}]
  %s1 = inlined_call_operand.vmem [shape: f32[2,3,128], index: 1, kind: input, shape index: {}]
  %s2 = inlined_call_operand.vmem [shape: f32[2,16,128], index: 2, kind: input, shape index: {}]
  %s3 = inlined_call_operand.hbm [shape: f32[2,128,128], index: 3, kind: input, shape index: {}]
  %s4 = inlined_call_operand.hbm [shape: f32[128,128], index: 4, kind: input, shape index: {}]
  %s5 = inlined_call_operand.hbm [shape: f32[128,128], index: 5, kind: input, shape index: {}]
  %s6 = inlined_call_operand.vmem [shape: f32[1,128], index: 6, kind: input, shape index: {}]
  %s7 = inlined_call_operand.vmem [shape: f32[1,128], index: 7, kind: input, shape index: {}]
  %s8 = inlined_call_operand.hbm [shape: f32[128,128], index: 8, kind: input, shape index: {}]
  %s9 = inlined_call_operand.vmem [shape: f32[1,128], index: 9, kind: input, shape index: {}]
  %s10 = inlined_call_operand.vmem [shape: f32[1,128], index: 10, kind: input, shape index: {}]
  %s11 = inlined_call_operand.hbm [shape: f32[2,16,128], index: 11, kind: output, shape index: {}]
  %s12 = sld [smem:[#allocation0]]
  $region93: #{tpu_custom_call.1} parent=0
    _
  %s14 = ssub.s32 1, %s12
  %s15 = scalar_select 0, %s14, %s12
  $region1: #{tpu_custom_call.1} parent=0
    #allocation2 [shape = 'u8[131072]{0}', space=vmem, size = 0x20000, scoped, tag = 'input window, operand 3']
    #allocation3 [shape = 's32[2]{0}', space=sflag, size = 0x8, scoped, tag = 'scoped memory for tpu_custom_call.1']
    #allocation4 [shape = 's32[2]{0}', space=sflag, size = 0x8, scoped, tag = 'scoped memory for tpu_custom_call.1']
    #allocation5 [shape = 'u8[65536]{0}', space=vmem, size = 0x10000, scoped, tag = 'input window, operand 4, single buffered']
    #allocation6 [shape = 's32[1]{0}', space=sflag, size = 0x4, scoped, tag = 'scoped memory for tpu_custom_call.1']
    #allocation7 [shape = 'u8[65536]{0}', space=vmem, size = 0x10000, scoped, tag = 'input window, operand 5, single buffered']
    #allocation8 [shape = 'u8[65536]{0}', space=vmem, size = 0x10000, scoped, tag = 'input window, operand 8, single buffered']
    #allocation9 [shape = 's32[1]{0}', space=sflag, size = 0x4, scoped, tag = 'scoped memory for tpu_custom_call.1']
    #allocation10 [shape = 'u8[16384]{0}', space=vmem, size = 0x4000, scoped, tag = 'output window, operand 0']
    %16 = vsyncpa [#allocation3], 0
    %s17 = scalar_lea.sflag [#allocation3], 1
    %18 = vsyncpa %s17, 0
    %19 = vsyncpa [#allocation6], 0
    %20 = vsyncpa [#allocation9], 0
    %21 = vsyncpa [#allocation4], 0
    %s22 = scalar_lea.sflag [#allocation4], 1
    %23 = vsyncpa %s22, 0
    loop: start=0, step=1, limit=4
    $region2: #{tpu_custom_call.1} parent=1 // loop_pre_header
      _
    $region3: #{tpu_custom_call.1} parent=1 // loop_header
      %s25 = sphi 0, %s29
      %p26 = scmp.ge.s32.totalorder %s25, 4
      %s32 = sphi 0, %s44
      %s33 = sphi 0, %s40
      %s34 = sphi 0, %s32
      %s35 = sphi 0, %s33
      %s36 = sphi 0, %s34
      %s37 = sphi 0, %s35
      %s49 = sphi 0, %s51
      %s52 = sphi 0, %s49
      %s53 = sphi 0, %s52
      %s69 = sphi 0, %s53
      %s75 = sphi 0, %s77
      %s78 = sphi 0, %s75
      %s79 = sphi 0, %s78
      %s95 = sphi 0, %s79
      %s103 = sphi 0, %s105
      %s106 = sphi 0, %s103
      %s107 = sphi 0, %s106
      %s123 = sphi 0, %s107
      %s129 = sphi 0, %s131
      %s132 = sphi 0, %s129
      %s133 = sphi 0, %s132
      %s149 = sphi 0, %s133
      %s153 = sphi 0, %s153
      %s155 = sphi 0, %s153
      %s156 = sphi 0, %s155
      %s170 = sphi 0, %s156
      %s174 = sphi 0, %s174
      %s176 = sphi 0, %s174
      %s177 = sphi 0, %s176
      %s191 = sphi 0, %s177
      %s195 = sphi 0, %s195
      %s197 = sphi 0, %s195
      %s198 = sphi 0, %s197
      %s212 = sphi 0, %s198
      %s216 = sphi 0, %s216
      %s218 = sphi 0, %s216
      %s219 = sphi 0, %s218
      %s233 = sphi 0, %s219
      %s237 = sphi 0, %s237
      %s239 = sphi 0, %s237
      %s240 = sphi 0, %s239
      %s254 = sphi 0, %s240
      %s258 = sphi 0, %s258
      %s260 = sphi 0, %s258
      %s261 = sphi 0, %s260
      %s275 = sphi 0, %s261
      %s279 = sphi 0, %s279
      %s281 = sphi 0, %s279
      %s282 = sphi 0, %s281
      %s296 = sphi 0, %s282
      %s304 = sphi 0, %s306
      %s307 = sphi 0, %s304
      %s308 = sphi 0, %s307
      %s324 = sphi 0, %s308
    $region4: #{tpu_custom_call.1} parent=1 // loop_header_branch
      %28 = sbr.rel (%p26) target = $region8
    $region5: #{tpu_custom_call.1} parent=1 // loop_body
      %s30 = ssub.s32 %s25, 1
      %s31 = ssub.s32 %s25, 2
      %s38 = sadd.s32 1, %s33
      %p39 = scmp.ge.s32.totalorder %s38, 1
      %s40 = scalar_select %p39, 0, %s38
      %s41 = sadd.s32 1, %s32
      %s42 = scalar_select %p39, %s41, %s32
      %p43 = scmp.ge.s32.totalorder %s42, 2
      %s44 = scalar_select %p43, 0, %s42
      %s45 = ssub.s32 %s32, %s44
      %s46 = ssub.s32 %s33, %s40
      %s47 = sor.u32 %s45, %s46
      %p48 = scmp.eq.s32.totalorder %s47, 0
      %s50 = sadd.s32 %s49, 1
      %s51 = scalar_select %p48, %s49, %s50
      %p54 = pneg %p48
      %p55 = scmp.eq.s32.totalorder %s25, 1
      %p56 = por %p54, %p55
      %p57 = scmp.ne.s32.totalorder %s49, %s52
      %p58 = scmp.eq.s32.totalorder %s25, 0
      %p59 = por %p57, %p58
      %p60 = scmp.ne.s32.totalorder %s49, %s52
      %p61 = scmp.eq.s32.totalorder %s30, 1
      %p62 = por %p60, %p61
      %p63 = scmp.ne.s32.totalorder %s52, %s53
      %p64 = scmp.eq.s32.totalorder %s30, 0
      %p65 = por %p63, %p64
      %p66 = scmp.ne.s32.totalorder %s52, %s53
      %p67 = scmp.eq.s32.totalorder %s31, 1
      %p68 = por %p66, %p67
      %p70 = scmp.ne.s32.totalorder %s53, %s69
      %p71 = scmp.eq.s32.totalorder %s31, 0
      %p72 = por %p70, %p71
      %s73 = ssub.s32 %s32, %s44
      %p74 = scmp.eq.s32.totalorder %s73, 0
      %s76 = sadd.s32 %s75, 1
      %s77 = scalar_select %p74, %s75, %s76
      %p80 = pneg %p74
      %p81 = scmp.eq.s32.totalorder %s25, 1
      %p82 = por %p80, %p81
      %p83 = scmp.ne.s32.totalorder %s75, %s78
      %p84 = scmp.eq.s32.totalorder %s25, 0
      %p85 = por %p83, %p84
      %p86 = scmp.ne.s32.totalorder %s75, %s78
      %p87 = scmp.eq.s32.totalorder %s30, 1
      %p88 = por %p86, %p87
      %p89 = scmp.ne.s32.totalorder %s78, %s79
      %p90 = scmp.eq.s32.totalorder %s30, 0
      %p91 = por %p89, %p90
      %p92 = scmp.ne.s32.totalorder %s78, %s79
      %p93 = scmp.eq.s32.totalorder %s31, 1
      %p94 = por %p92, %p93
      %p96 = scmp.ne.s32.totalorder %s79, %s95
      %p97 = scmp.eq.s32.totalorder %s31, 0
      %p98 = por %p96, %p97
      %s99 = ssub.s32 %s32, %s44
      %s100 = ssub.s32 %s33, %s40
      %s101 = sor.u32 %s99, %s100
      %p102 = scmp.eq.s32.totalorder %s101, 0
      %s104 = sadd.s32 %s103, 1
      %s105 = scalar_select %p102, %s103, %s104
      %p108 = pneg %p102
      %p109 = scmp.eq.s32.totalorder %s25, 1
      %p110 = por %p108, %p109
      %p111 = scmp.ne.s32.totalorder %s103, %s106
      %p112 = scmp.eq.s32.totalorder %s25, 0
      %p113 = por %p111, %p112
      %p114 = scmp.ne.s32.totalorder %s103, %s106
      %p115 = scmp.eq.s32.totalorder %s30, 1
      %p116 = por %p114, %p115
      %p117 = scmp.ne.s32.totalorder %s106, %s107
      %p118 = scmp.eq.s32.totalorder %s30, 0
      %p119 = por %p117, %p118
      %p120 = scmp.ne.s32.totalorder %s106, %s107
      %p121 = scmp.eq.s32.totalorder %s31, 1
      %p122 = por %p120, %p121
      %p124 = scmp.ne.s32.totalorder %s107, %s123
      %p125 = scmp.eq.s32.totalorder %s31, 0
      %p126 = por %p124, %p125
      %s127 = ssub.s32 %s32, %s44
      %p128 = scmp.eq.s32.totalorder %s127, 0
      %s130 = sadd.s32 %s129, 1
      %s131 = scalar_select %p128, %s129, %s130
      %p134 = pneg %p128
      %p135 = scmp.eq.s32.totalorder %s25, 1
      %p136 = por %p134, %p135
      %p137 = scmp.ne.s32.totalorder %s129, %s132
      %p138 = scmp.eq.s32.totalorder %s25, 0
      %p139 = por %p137, %p138
      %p140 = scmp.ne.s32.totalorder %s129, %s132
      %p141 = scmp.eq.s32.totalorder %s30, 1
      %p142 = por %p140, %p141
      %p143 = scmp.ne.s32.totalorder %s132, %s133
      %p144 = scmp.eq.s32.totalorder %s30, 0
      %p145 = por %p143, %p144
      %p146 = scmp.ne.s32.totalorder %s132, %s133
      %p147 = scmp.eq.s32.totalorder %s31, 1
      %p148 = por %p146, %p147
      %p150 = scmp.ne.s32.totalorder %s133, %s149
      %p151 = scmp.eq.s32.totalorder %s31, 0
      %p152 = por %p150, %p151
      %s154 = sadd.s32 %s153, 1
      %p157 = scmp.eq.s32.totalorder %s25, 1
      %p158 = scmp.ne.s32.totalorder %s153, %s155
      %p159 = scmp.eq.s32.totalorder %s25, 0
      %p160 = por %p158, %p159
      %p161 = scmp.ne.s32.totalorder %s153, %s155
      %p162 = scmp.eq.s32.totalorder %s30, 1
      %p163 = por %p161, %p162
      %p164 = scmp.ne.s32.totalorder %s155, %s156
      %p165 = scmp.eq.s32.totalorder %s30, 0
      %p166 = por %p164, %p165
      %p167 = scmp.ne.s32.totalorder %s155, %s156
      %p168 = scmp.eq.s32.totalorder %s31, 1
      %p169 = por %p167, %p168
      %p171 = scmp.ne.s32.totalorder %s156, %s170
      %p172 = scmp.eq.s32.totalorder %s31, 0
      %p173 = por %p171, %p172
      %s175 = sadd.s32 %s174, 1
      %p178 = scmp.eq.s32.totalorder %s25, 1
      %p179 = scmp.ne.s32.totalorder %s174, %s176
      %p180 = scmp.eq.s32.totalorder %s25, 0
      %p181 = por %p179, %p180
      %p182 = scmp.ne.s32.totalorder %s174, %s176
      %p183 = scmp.eq.s32.totalorder %s30, 1
      %p184 = por %p182, %p183
      %p185 = scmp.ne.s32.totalorder %s176, %s177
      %p186 = scmp.eq.s32.totalorder %s30, 0
      %p187 = por %p185, %p186
      %p188 = scmp.ne.s32.totalorder %s176, %s177
      %p189 = scmp.eq.s32.totalorder %s31, 1
      %p190 = por %p188, %p189
      %p192 = scmp.ne.s32.totalorder %s177, %s191
      %p193 = scmp.eq.s32.totalorder %s31, 0
      %p194 = por %p192, %p193
      %s196 = sadd.s32 %s195, 1
      %p199 = scmp.eq.s32.totalorder %s25, 1
      %p200 = scmp.ne.s32.totalorder %s195, %s197
      %p201 = scmp.eq.s32.totalorder %s25, 0
      %p202 = por %p200, %p201
      %p203 = scmp.ne.s32.totalorder %s195, %s197
      %p204 = scmp.eq.s32.totalorder %s30, 1
      %p205 = por %p203, %p204
      %p206 = scmp.ne.s32.totalorder %s197, %s198
      %p207 = scmp.eq.s32.totalorder %s30, 0
      %p208 = por %p206, %p207
      %p209 = scmp.ne.s32.totalorder %s197, %s198
      %p210 = scmp.eq.s32.totalorder %s31, 1
      %p211 = por %p209, %p210
      %p213 = scmp.ne.s32.totalorder %s198, %s212
      %p214 = scmp.eq.s32.totalorder %s31, 0
      %p215 = por %p213, %p214
      %s217 = sadd.s32 %s216, 1
      %p220 = scmp.eq.s32.totalorder %s25, 1
      %p221 = scmp.ne.s32.totalorder %s216, %s218
      %p222 = scmp.eq.s32.totalorder %s25, 0
      %p223 = por %p221, %p222
      %p224 = scmp.ne.s32.totalorder %s216, %s218
      %p225 = scmp.eq.s32.totalorder %s30, 1
      %p226 = por %p224, %p225
      %p227 = scmp.ne.s32.totalorder %s218, %s219
      %p228 = scmp.eq.s32.totalorder %s30, 0
      %p229 = por %p227, %p228
      %p230 = scmp.ne.s32.totalorder %s218, %s219
      %p231 = scmp.eq.s32.totalorder %s31, 1
      %p232 = por %p230, %p231
      %p234 = scmp.ne.s32.totalorder %s219, %s233
      %p235 = scmp.eq.s32.totalorder %s31, 0
      %p236 = por %p234, %p235
      %s238 = sadd.s32 %s237, 1
      %p241 = scmp.eq.s32.totalorder %s25, 1
      %p242 = scmp.ne.s32.totalorder %s237, %s239
      %p243 = scmp.eq.s32.totalorder %s25, 0
      %p244 = por %p242, %p243
      %p245 = scmp.ne.s32.totalorder %s237, %s239
      %p246 = scmp.eq.s32.totalorder %s30, 1
      %p247 = por %p245, %p246
      %p248 = scmp.ne.s32.totalorder %s239, %s240
      %p249 = scmp.eq.s32.totalorder %s30, 0
      %p250 = por %p248, %p249
      %p251 = scmp.ne.s32.totalorder %s239, %s240
      %p252 = scmp.eq.s32.totalorder %s31, 1
      %p253 = por %p251, %p252
      %p255 = scmp.ne.s32.totalorder %s240, %s254
      %p256 = scmp.eq.s32.totalorder %s31, 0
      %p257 = por %p255, %p256
      %s259 = sadd.s32 %s258, 1
      %p262 = scmp.eq.s32.totalorder %s25, 1
      %p263 = scmp.ne.s32.totalorder %s258, %s260
      %p264 = scmp.eq.s32.totalorder %s25, 0
      %p265 = por %p263, %p264
      %p266 = scmp.ne.s32.totalorder %s258, %s260
      %p267 = scmp.eq.s32.totalorder %s30, 1
      %p268 = por %p266, %p267
      %p269 = scmp.ne.s32.totalorder %s260, %s261
      %p270 = scmp.eq.s32.totalorder %s30, 0
      %p271 = por %p269, %p270
      %p272 = scmp.ne.s32.totalorder %s260, %s261
      %p273 = scmp.eq.s32.totalorder %s31, 1
      %p274 = por %p272, %p273
      %p276 = scmp.ne.s32.totalorder %s261, %s275
      %p277 = scmp.eq.s32.totalorder %s31, 0
      %p278 = por %p276, %p277
      %s280 = sadd.s32 %s279, 1
      %p283 = scmp.eq.s32.totalorder %s25, 1
      %p284 = scmp.ne.s32.totalorder %s279, %s281
      %p285 = scmp.eq.s32.totalorder %s25, 0
      %p286 = por %p284, %p285
      %p287 = scmp.ne.s32.totalorder %s279, %s281
      %p288 = scmp.eq.s32.totalorder %s30, 1
      %p289 = por %p287, %p288
      %p290 = scmp.ne.s32.totalorder %s281, %s282
      %p291 = scmp.eq.s32.totalorder %s30, 0
      %p292 = por %p290, %p291
      %p293 = scmp.ne.s32.totalorder %s281, %s282
      %p294 = scmp.eq.s32.totalorder %s31, 1
      %p295 = por %p293, %p294
      %p297 = scmp.ne.s32.totalorder %s282, %s296
      %p298 = scmp.eq.s32.totalorder %s31, 0
      %p299 = por %p297, %p298
      %s300 = ssub.s32 %s32, %s44
      %s301 = ssub.s32 %s33, %s40
      %s302 = sor.u32 %s300, %s301
      %p303 = scmp.eq.s32.totalorder %s302, 0
      %s305 = sadd.s32 %s304, 1
      %s306 = scalar_select %p303, %s304, %s305
      %p309 = pneg %p303
      %p310 = scmp.eq.s32.totalorder %s25, 1
      %p311 = por %p309, %p310
      %p312 = scmp.ne.s32.totalorder %s304, %s307
      %p313 = scmp.eq.s32.totalorder %s25, 0
      %p314 = por %p312, %p313
      %p315 = scmp.ne.s32.totalorder %s304, %s307
      %p316 = scmp.eq.s32.totalorder %s30, 1
      %p317 = por %p315, %p316
      %p318 = scmp.ne.s32.totalorder %s307, %s308
      %p319 = scmp.eq.s32.totalorder %s30, 0
      %p320 = por %p318, %p319
      %p321 = scmp.ne.s32.totalorder %s307, %s308
      %p322 = scmp.eq.s32.totalorder %s31, 1
      %p323 = por %p321, %p322
      %p325 = scmp.ne.s32.totalorder %s308, %s324
      %p326 = scmp.eq.s32.totalorder %s31, 0
      %p327 = por %p325, %p326
      %p328 = scmp.le.s32.totalorder 1, %s25
      %p329 = scmp.lt.s32.totalorder %s25, 3
      %p330 = pnand %p328, %p329
      %p331 = pneg %p330
      // Predicated region
      $region9: #{tpu_custom_call.1} parent=5 // pred_check
        _
      $region10: #{tpu_custom_call.1} parent=5 // pred_check_branch
        %333 = sbr.rel (%p330) target = $region12
      $region11: #{tpu_custom_call.1} parent=5 // pred_region
        %s334 = ssub.s32 %s25, 1
        // Predicated region
        $region13: #{tpu_custom_call.1} parent=11 // pred_check
          %p335 = pneg %p166
        $region14: #{tpu_custom_call.1} parent=11 // pred_check_branch
          %337 = sbr.rel (%p335) target = $region16
        $region15: #{tpu_custom_call.1} parent=11 // pred_region
          %339 = vsyncadd [#allocation6], 0
          %s340 = sshll.u32 %s4, 4
          %s341 = int_to_ptr.hbm [resolvable:$true] %s340
          %s342 = sshll.u32 [#allocation5], 4
          %s343 = int_to_ptr.vmem [resolvable:$true] %s342
          %348 = dma.hbm_to_vmem [thread:$0]  %s341, 2048, %s343, [#allocation6], 128, 128, 8
        $region16: #{tpu_custom_call.1} parent=11 // pred_fallthru
          _
        // Predicated region
        $region17: #{tpu_custom_call.1} parent=11 // pred_check
          %p349 = pneg %p187
        $region18: #{tpu_custom_call.1} parent=11 // pred_check_branch
          %351 = sbr.rel (%p349) target = $region20
        $region19: #{tpu_custom_call.1} parent=11 // pred_region
          %353 = vsyncadd [#allocation6], 0
          %s354 = sshll.u32 %s5, 4
          %s355 = int_to_ptr.hbm [resolvable:$true] %s354
          %s356 = sshll.u32 [#allocation7], 4
          %s357 = int_to_ptr.vmem [resolvable:$true] %s356
          %362 = dma.hbm_to_vmem [thread:$0]  %s355, 2048, %s357, [#allocation6], 128, 128, 8
        $region20: #{tpu_custom_call.1} parent=11 // pred_fallthru
          _
        // Predicated region
        $region21: #{tpu_custom_call.1} parent=11 // pred_check
          %p363 = pneg %p208
        $region22: #{tpu_custom_call.1} parent=11 // pred_check_branch
          %365 = sbr.rel (%p363) target = $region24
        $region23: #{tpu_custom_call.1} parent=11 // pred_region
          _
        $region24: #{tpu_custom_call.1} parent=11 // pred_fallthru
          _
        // Predicated region
        $region25: #{tpu_custom_call.1} parent=11 // pred_check
          %p366 = pneg %p229
        $region26: #{tpu_custom_call.1} parent=11 // pred_check_branch
          %368 = sbr.rel (%p366) target = $region28
        $region27: #{tpu_custom_call.1} parent=11 // pred_region
          _
        $region28: #{tpu_custom_call.1} parent=11 // pred_fallthru
          _
        // Predicated region
        $region29: #{tpu_custom_call.1} parent=11 // pred_check
          %p369 = pneg %p250
        $region30: #{tpu_custom_call.1} parent=11 // pred_check_branch
          %371 = sbr.rel (%p369) target = $region32
        $region31: #{tpu_custom_call.1} parent=11 // pred_region
          %373 = vsyncadd [#allocation9], 0
          %s374 = sshll.u32 %s8, 4
          %s375 = int_to_ptr.hbm [resolvable:$true] %s374
          %s376 = sshll.u32 [#allocation8], 4
          %s377 = int_to_ptr.vmem [resolvable:$true] %s376
          %382 = dma.hbm_to_vmem [thread:$0]  %s375, 2048, %s377, [#allocation9], 128, 128, 8
        $region32: #{tpu_custom_call.1} parent=11 // pred_fallthru
          _
        // Predicated region
        $region33: #{tpu_custom_call.1} parent=11 // pred_check
          %p383 = pneg %p271
        $region34: #{tpu_custom_call.1} parent=11 // pred_check_branch
          %385 = sbr.rel (%p383) target = $region36
        $region35: #{tpu_custom_call.1} parent=11 // pred_region
          _
        $region36: #{tpu_custom_call.1} parent=11 // pred_fallthru
          _
        // Predicated region
        $region37: #{tpu_custom_call.1} parent=11 // pred_check
          %p386 = pneg %p292
        $region38: #{tpu_custom_call.1} parent=11 // pred_check_branch
          %388 = sbr.rel (%p386) target = $region40
        $region39: #{tpu_custom_call.1} parent=11 // pred_region
          _
        $region40: #{tpu_custom_call.1} parent=11 // pred_fallthru
          _
      $region12: #{tpu_custom_call.1} parent=5 // pred_fallthru
        _
      %p389 = scmp.lt.s32.totalorder %s25, 2
      // Predicated region
      $region41: #{tpu_custom_call.1} parent=5 // pred_check
        %p390 = pneg %p389
      $region42: #{tpu_custom_call.1} parent=5 // pred_check_branch
        %392 = sbr.rel (%p390) target = $region44
      $region43: #{tpu_custom_call.1} parent=5 // pred_region
        // Predicated region
        $region45: #{tpu_custom_call.1} parent=43 // pred_check
          %p393 = pneg %p59
        $region46: #{tpu_custom_call.1} parent=43 // pred_check_branch
          %395 = sbr.rel (%p393) target = $region48
        $region47: #{tpu_custom_call.1} parent=43 // pred_region
          %s396 = smul.u32 2, %s33
          %p397 = scmp.lt.s32.totalorder %s32, 1
          %s398 = scalar_select %p397, %s32, 1
          %p399 = scmp.lt.s32.totalorder %s396, 1
          %s400 = scalar_select %p399, %s396, 1
          %s401 = smul.addr %s398, 2
          %s402 = sadd.s32 %s400, %s401
          %s403 = smul.addr %s402, 8
          %s404 = scalar_lea.vmem %s0, %s403
          %s405 = smul.u32 2, %s33
        $region48: #{tpu_custom_call.1} parent=43 // pred_fallthru
          _
        // Predicated region
        $region49: #{tpu_custom_call.1} parent=43 // pred_check
          %p406 = pneg %p85
        $region50: #{tpu_custom_call.1} parent=43 // pred_check_branch
          %408 = sbr.rel (%p406) target = $region52
        $region51: #{tpu_custom_call.1} parent=43 // pred_region
          %p409 = scmp.lt.s32.totalorder %s32, 1
          %s410 = scalar_select %p409, %s32, 1
          %s411 = smul.addr %s410, 4
          %s412 = scalar_lea.vmem %s1, %s411
        $region52: #{tpu_custom_call.1} parent=43 // pred_fallthru
          _
        // Predicated region
        $region53: #{tpu_custom_call.1} parent=43 // pred_check
          %p413 = pneg %p113
        $region54: #{tpu_custom_call.1} parent=43 // pred_check_branch
          %415 = sbr.rel (%p413) target = $region56
        $region55: #{tpu_custom_call.1} parent=43 // pred_region
          %s416 = smul.u32 2, %s33
          %p417 = scmp.lt.s32.totalorder %s32, 1
          %s418 = scalar_select %p417, %s32, 1
          %p419 = scmp.lt.s32.totalorder %s416, 1
          %s420 = scalar_select %p419, %s416, 1
          %s421 = smul.addr %s418, 2
          %s422 = sadd.s32 %s420, %s421
          %s423 = smul.addr %s422, 8
          %s424 = scalar_lea.vmem %s2, %s423
          %s425 = smul.u32 2, %s33
        $region56: #{tpu_custom_call.1} parent=43 // pred_fallthru
          _
        // Predicated region
        $region57: #{tpu_custom_call.1} parent=43 // pred_check
          %p426 = pneg %p139
        $region58: #{tpu_custom_call.1} parent=43 // pred_check_branch
          %428 = sbr.rel (%p426) target = $region60
        $region59: #{tpu_custom_call.1} parent=43 // pred_region
          %s429 = sand.u32 %s129, 1
          %s430 = scalar_lea.sflag [#allocation3], %s429
          %s431 = sand.u32 %s129, 1
          %s432 = smul.addr %s431, 128
          %s433 = scalar_lea.vmem [#allocation2], %s432
          %435 = vsyncadd %s430, 0
          %s436 = smul.addr %s32, 16
          %s437 = smul.addr %s436, 8
          %s438 = scalar_lea.hbm %s3, %s437
          %s439 = sshll.u32 %s438, 4
          %s440 = int_to_ptr.hbm [resolvable:$true] %s439
          %s441 = sshll.u32 %s433, 4
          %s442 = int_to_ptr.vmem [resolvable:$true] %s441
          %447 = dma.hbm_to_vmem [thread:$0]  %s440, 2048, %s442, %s430, 128, 128, 8
        $region60: #{tpu_custom_call.1} parent=43 // pred_fallthru
          _
      $region44: #{tpu_custom_call.1} parent=5 // pred_fallthru
        _
      %p448 = scmp.le.s32.totalorder 1, %s25
      %p449 = scmp.lt.s32.totalorder %s25, 3
      %p450 = pnand %p448, %p449
      %p451 = pneg %p450
      // Predicated region
      $region61: #{tpu_custom_call.1} parent=5 // pred_check
        _
      $region62: #{tpu_custom_call.1} parent=5 // pred_check_branch
        %453 = sbr.rel (%p450) target = $region64
      $region63: #{tpu_custom_call.1} parent=5 // pred_region
        %s454 = ssub.s32 %s25, 1
        %s455 = sand.u32 %s132, 1
        %s456 = scalar_lea.sflag [#allocation3], %s455
        %s457 = sand.u32 %s132, 1
        %s458 = smul.addr %s457, 128
        %s459 = scalar_lea.vmem [#allocation2], %s458
        // Predicated region
        $region65: #{tpu_custom_call.1} parent=63 // pred_check
          %p460 = pneg %p145
        $region66: #{tpu_custom_call.1} parent=63 // pred_check_branch
          %462 = sbr.rel (%p460) target = $region68
        $region67: #{tpu_custom_call.1} parent=63 // pred_region
          %464 = dma.done %s456, 2048
        $region68: #{tpu_custom_call.1} parent=63 // pred_fallthru
          _
        // Predicated region
        $region69: #{tpu_custom_call.1} parent=63 // pred_check
          %p465 = pneg %p166
        $region70: #{tpu_custom_call.1} parent=63 // pred_check_branch
          %467 = sbr.rel (%p465) target = $region72
        $region71: #{tpu_custom_call.1} parent=63 // pred_region
          %469 = dma.done [#allocation6], 2048
        $region72: #{tpu_custom_call.1} parent=63 // pred_fallthru
          _
        // Predicated region
        $region73: #{tpu_custom_call.1} parent=63 // pred_check
          %p470 = pneg %p187
        $region74: #{tpu_custom_call.1} parent=63 // pred_check_branch
          %472 = sbr.rel (%p470) target = $region76
        $region75: #{tpu_custom_call.1} parent=63 // pred_region
          %474 = dma.done [#allocation6], 2048
        $region76: #{tpu_custom_call.1} parent=63 // pred_fallthru
          _
        // Predicated region
        $region77: #{tpu_custom_call.1} parent=63 // pred_check
          %p475 = pneg %p250
        $region78: #{tpu_custom_call.1} parent=63 // pred_check_branch
          %477 = sbr.rel (%p475) target = $region80
        $region79: #{tpu_custom_call.1} parent=63 // pred_region
          %479 = dma.done [#allocation9], 2048
        $region80: #{tpu_custom_call.1} parent=63 // pred_fallthru
          _
        %s480 = smul.u32 2, %s35
        %p481 = scmp.lt.s32.totalorder %s34, 1
        %s482 = scalar_select %p481, %s34, 1
        %p483 = scmp.lt.s32.totalorder %s480, 1
        %s484 = scalar_select %p483, %s480, 1
        %s485 = smul.addr %s482, 2
        %s486 = sadd.s32 %s484, %s485
        %s487 = smul.addr %s486, 8
        %s488 = scalar_lea.vmem %s0, %s487
        %p489 = pneg %p65
        %p490 = pneg %p62
        %p491 = scmp.lt.s32.totalorder %s34, 1
        %s492 = scalar_select %p491, %s34, 1
        %s493 = smul.addr %s492, 4
        %s494 = scalar_lea.vmem %s1, %s493
        %p495 = pneg %p91
        %p496 = pneg %p88
        %s497 = smul.u32 2, %s35
        %p498 = scmp.lt.s32.totalorder %s34, 1
        %s499 = scalar_select %p498, %s34, 1
        %p500 = scmp.lt.s32.totalorder %s497, 1
        %s501 = scalar_select %p500, %s497, 1
        %s502 = smul.addr %s499, 2
        %s503 = sadd.s32 %s501, %s502
        %s504 = smul.addr %s503, 8
        %s505 = scalar_lea.vmem %s2, %s504
        %p506 = pneg %p119
        %p507 = pneg %p116
        %s508 = sand.u32 %s132, 1
        %s509 = scalar_lea.sflag [#allocation3], %s508
        %s510 = sand.u32 %s132, 1
        %s511 = smul.addr %s510, 128
        %s512 = scalar_lea.vmem [#allocation2], %s511
        %p513 = pneg %p145
        %p514 = pneg %p142
        %p515 = pneg %p166
        %p516 = pneg %p163
        %p517 = pneg %p187
        %p518 = pneg %p184
        %p519 = pneg %p208
        %p520 = pneg %p205
        %p521 = pneg %p229
        %p522 = pneg %p226
        %p523 = pneg %p250
        %p524 = pneg %p247
        %p525 = pneg %p271
        %p526 = pneg %p268
        %p527 = pneg %p292
        %p528 = pneg %p289
        %p529 = pneg %p320
        %p530 = pneg %p317
        %s531 = sand.u32 %s307, 1
        %s532 = scalar_lea.sflag [#allocation4], %s531
        %s533 = sand.u32 %s307, 1
        %s534 = smul.addr %s533, 16
        %s535 = scalar_lea.vmem [#allocation10], %s534
        %s536 = smul.u32 2, %s35
        %p537 = scmp.lt.s32.totalorder %s34, 1
        %s538 = scalar_select %p537, %s34, 1
        %p539 = scmp.lt.s32.totalorder %s536, 1
        %s540 = scalar_select %p539, %s536, 1
        %s541 = smul.addr %s538, 2
        %s542 = sadd.s32 %s540, %s541
        %s543 = smul.addr %s542, 8
        %s544 = scalar_lea.vmem %s0, %s543
        %s545 = smul.u32 2, %s35
        %p546 = scmp.lt.s32.totalorder %s34, 1
        %s547 = scalar_select %p546, %s34, 1
        %s548 = smul.addr %s547, 4
        %s549 = scalar_lea.vmem %s1, %s548
        %s550 = smul.u32 2, %s35
        %p551 = scmp.lt.s32.totalorder %s34, 1
        %s552 = scalar_select %p551, %s34, 1
        %p553 = scmp.lt.s32.totalorder %s550, 1
        %s554 = scalar_select %p553, %s550, 1
        %s555 = smul.addr %s552, 2
        %s556 = sadd.s32 %s554, %s555
        %s557 = smul.addr %s556, 8
        %s558 = scalar_lea.vmem %s2, %s557
        %s559 = smul.u32 2, %s35
        %s560 = smul.u32 2, %s35
        %v561 = vld [vmem:[%s544] sm:$0xff]
        %v562 = vld [vmem:[%s544 + $0x8] sm:$0xff]
        %v563 = vld [vmem:[%s549] sm:$0x7]
        %v564 = vld [vmem:[%s558] sm:$0xff]
        %v565 = vld [vmem:[%s558 + $0x8] sm:$0xff]
        %v566 = vld [vmem:[%s459] sm:$0xff]
        %v567 = vld [vmem:[%s459 + $0x8] sm:$0xff]
        %v568 = vld [vmem:[%s459 + $0x10] sm:$0xff]
        %v569 = vld [vmem:[%s459 + $0x18] sm:$0xff]
        %v570 = vld [vmem:[%s459 + $0x20] sm:$0xff]
        %v571 = vld [vmem:[%s459 + $0x28] sm:$0xff]
        %v572 = vld [vmem:[%s459 + $0x30] sm:$0xff]
        %v573 = vld [vmem:[%s459 + $0x38] sm:$0xff]
        %v574 = vld [vmem:[%s459 + $0x40] sm:$0xff]
        %v575 = vld [vmem:[%s459 + $0x48] sm:$0xff]
        %v576 = vld [vmem:[%s459 + $0x50] sm:$0xff]
        %v577 = vld [vmem:[%s459 + $0x58] sm:$0xff]
        %v578 = vld [vmem:[%s459 + $0x60] sm:$0xff]
        %v579 = vld [vmem:[%s459 + $0x68] sm:$0xff]
        %v580 = vld [vmem:[%s459 + $0x70] sm:$0xff]
        %v581 = vld [vmem:[%s459 + $0x78] sm:$0xff]
        %583 = vset.pattern.permute.xlu0 0
        %584 = vperm.xlu0 %583, %v561
        %v585 = vpop.permute.xlu0 %584
        %588 = vset.pattern.permute.xlu0 0
        %589 = vperm.xlu0 %588, %v562
        %v590 = vpop.permute.xlu0 %589
        %v592 = vperm.slane %v563, 0
        %v593 = vsub.f32 %v585, %v592
        %v594 = vsub.f32 %v590, %v592
        %v595 = vmul.f32 %v593, %v593
        %v596 = vmul.f32 %v594, %v594
        %597 = vset.pattern.permute.xlu0 1
        %598 = vperm.xlu0 %597, %v561
        %v599 = vpop.permute.xlu0 %598
        %601 = vset.pattern.permute.xlu0 1
        %602 = vperm.xlu0 %601, %v562
        %v603 = vpop.permute.xlu0 %602
        %v605 = vperm.slane %v563, 1
        %v606 = vsub.f32 %v599, %v605
        %v607 = vsub.f32 %v603, %v605
        %v608 = vmul.f32 %v606, %v606
        %v609 = vmul.f32 %v607, %v607
        %v610 = vadd.f32 %v595, %v608
        %v611 = vadd.f32 %v596, %v609
        %612 = vset.pattern.permute.xlu0 2
        %613 = vperm.xlu0 %612, %v561
        %v614 = vpop.permute.xlu0 %613
        %616 = vset.pattern.permute.xlu0 2
        %617 = vperm.xlu0 %616, %v562
        %v618 = vpop.permute.xlu0 %617
        %v620 = vperm.slane %v563, 2
        %v621 = vsub.f32 %v614, %v620
        %v622 = vsub.f32 %v618, %v620
        %v623 = vmul.f32 %v621, %v621
        %v624 = vmul.f32 %v622, %v622
        %v625 = vadd.f32 %v610, %v623
        %v626 = vadd.f32 %v611, %v624
        %v627 = vlaneseq
        %v628 = vand.u32 %v627, 127
        %v631 = vand.u32 %v625, 4294967168
        %v632 = vand.u32 %v626, 4294967168
        %v633 = vor.u32 %v631, %v628
        %v634 = vor.u32 %v632, %v628
        %v635 = vand.u32 %v633, 65535
        %v636 = vshra.s32 %v633, 16
        %v637 = vcvt.s32.f32 %v635
        %v638 = vcvt.s32.f32 %v636
        %639 = vmin.xlane.f32.xlu0 %v638
        %v640 = vpop.xlane.xlu0 %639
        %vm641 = vcmp.eq.f32.partialorder %v638, %v640
        %v642 = vsel %vm641, %v637, inf
        %643 = vmin.xlane.f32.xlu0 %v642
        %v644 = vpop.xlane.xlu0 %643
        %v645 = vcvt.f32.s32 %v644
        %v646 = vcvt.f32.s32 %v640
        %v647 = vshll.u32 %v646, 16
        %v648 = vadd.s32 %v647, %v645
        %v649 = vand.u32 %v634, 65535
        %v650 = vshra.s32 %v634, 16
        %v651 = vcvt.s32.f32 %v649
        %v652 = vcvt.s32.f32 %v650
        %653 = vmin.xlane.f32.xlu0 %v652
        %v654 = vpop.xlane.xlu0 %653
        %vm655 = vcmp.eq.f32.partialorder %v652, %v654
        %v656 = vsel %vm655, %v651, inf
        %657 = vmin.xlane.f32.xlu0 %v656
        %v658 = vpop.xlane.xlu0 %657
        %v659 = vcvt.f32.s32 %v658
        %v660 = vcvt.f32.s32 %v654
        %v661 = vshll.u32 %v660, 16
        %v662 = vadd.s32 %v661, %v659
        %v663 = vand.u32 %v648, 4294967168
        %v664 = vand.u32 %v662, 4294967168
        %v667 = vrsqrt.pop %v663
        %v668 = vmul.f32 %v667, %v663
        %v669 = vmul.f32 %v668, %v667
        %v670 = vmul.f32 0.5, %v669
        %v671 = vsub.f32 1.5, %v670
        %v672 = vmul.f32 %v667, %v671
        %v673 = vmul.f32 %v663, %v672
        %vm674 = vcmp.eq.f32.partialorder %v663, inf
        %v675 = vsel %vm674, %v663, %v673
        %vm676 = vcmp.eq.f32.partialorder %v663, 0.0
        %v677 = vand.u32 %v663, 2147483648
        %v678 = vsel %vm676, %v677, %v675
        %v679 = vrsqrt.pop %v664
        %v680 = vmul.f32 %v679, %v664
        %v681 = vmul.f32 %v680, %v679
        %v682 = vmul.f32 0.5, %v681
        %v683 = vsub.f32 1.5, %v682
        %v684 = vmul.f32 %v679, %v683
        %v685 = vmul.f32 %v664, %v684
        %vm686 = vcmp.eq.f32.partialorder %v664, inf
        %v687 = vsel %vm686, %v664, %v685
        %vm688 = vcmp.eq.f32.partialorder %v664, 0.0
        %v689 = vand.u32 %v664, 2147483648
        %v690 = vsel %vm688, %v689, %v687
        %v691 = vadd.f32 %v678, 1e-08
        %v692 = vadd.f32 %v690, 1e-08
        %v693 = vrcp.pop %v691
        %v694 = vmul.f32 %v691, %v693
        %v695 = vsub.f32 1.0, %v694
        %v696 = vmul.f32 %v693, %v695
        %v697 = vadd.f32 %v693, %v696
        %vm698 = vweird.f32 %v691
        %vm699 = vweird.f32 %v693
        %vm700 = vmor %vm698, %vm699
        %v701 = vsel %vm700, %v693, %v697
        %v702 = vand.u32 2147483647, %v691
        %vm703 = vcmp.eq.f32.partialorder %v702, 8.507059e+37
        %v704 = vand.u32 %v691, 2147483648
        %v705 = vor.u32 1.1754944e-38, %v704
        %v706 = vsel %vm703, %v705, %v701
        %v707 = vmul.f32 1.0, %v706
        %v708 = vrcp.pop %v692
        %v709 = vmul.f32 %v692, %v708
        %v710 = vsub.f32 1.0, %v709
        %v711 = vmul.f32 %v708, %v710
        %v712 = vadd.f32 %v708, %v711
        %vm713 = vweird.f32 %v692
        %vm714 = vweird.f32 %v708
        %vm715 = vmor %vm713, %vm714
        %v716 = vsel %vm715, %v708, %v712
        %v717 = vand.u32 2147483647, %v692
        %vm718 = vcmp.eq.f32.partialorder %v717, 8.507059e+37
        %v719 = vand.u32 %v692, 2147483648
        %v720 = vor.u32 1.1754944e-38, %v719
        %v721 = vsel %vm718, %v720, %v716
        %v722 = vmul.f32 1.0, %v721
        %vm723 = vcmp.eq.s32.totalorder %v633, %v648
        %vm724 = vcmp.eq.s32.totalorder %v634, %v662
        %v725 = vsel %vm723, %v707, 0.0
        %v726 = vsel %vm724, %v722, 0.0
        %v727 = vadd.f32 %v707, 0.0
        %v728 = vadd.f32 %v722, 0.0
        %v729 = vsel %vm723, 2147483647, %v633
        %v730 = vsel %vm724, 2147483647, %v634
        %v731 = vand.u32 %v729, 65535
        %v732 = vshra.s32 %v729, 16
        %v733 = vcvt.s32.f32 %v731
        %v734 = vcvt.s32.f32 %v732
        %735 = vmin.xlane.f32.xlu0 %v734
        %v736 = vpop.xlane.xlu0 %735
        %vm737 = vcmp.eq.f32.partialorder %v734, %v736
        %v738 = vsel %vm737, %v733, inf
        %739 = vmin.xlane.f32.xlu0 %v738
        %v740 = vpop.xlane.xlu0 %739
        %v741 = vcvt.f32.s32 %v740
        %v742 = vcvt.f32.s32 %v736
        %v743 = vshll.u32 %v742, 16
        %v744 = vadd.s32 %v743, %v741
        %v745 = vand.u32 %v730, 65535
        %v746 = vshra.s32 %v730, 16
        %v747 = vcvt.s32.f32 %v745
        %v748 = vcvt.s32.f32 %v746
        %749 = vmin.xlane.f32.xlu0 %v748
        %v750 = vpop.xlane.xlu0 %749
        %vm751 = vcmp.eq.f32.partialorder %v748, %v750
        %v752 = vsel %vm751, %v747, inf
        %753 = vmin.xlane.f32.xlu0 %v752
        %v754 = vpop.xlane.xlu0 %753
        %v755 = vcvt.f32.s32 %v754
        %v756 = vcvt.f32.s32 %v750
        %v757 = vshll.u32 %v756, 16
        %v758 = vadd.s32 %v757, %v755
        %v759 = vand.u32 %v744, 4294967168
        %v760 = vand.u32 %v758, 4294967168
        %v763 = vrsqrt.pop %v759
        %v764 = vmul.f32 %v763, %v759
        %v765 = vmul.f32 %v764, %v763
        %v766 = vmul.f32 0.5, %v765
        %v767 = vsub.f32 1.5, %v766
        %v768 = vmul.f32 %v763, %v767
        %v769 = vmul.f32 %v759, %v768
        %vm770 = vcmp.eq.f32.partialorder %v759, inf
        %v771 = vsel %vm770, %v759, %v769
        %vm772 = vcmp.eq.f32.partialorder %v759, 0.0
        %v773 = vand.u32 %v759, 2147483648
        %v774 = vsel %vm772, %v773, %v771
        %v775 = vrsqrt.pop %v760
        %v776 = vmul.f32 %v775, %v760
        %v777 = vmul.f32 %v776, %v775
        %v778 = vmul.f32 0.5, %v777
        %v779 = vsub.f32 1.5, %v778
        %v780 = vmul.f32 %v775, %v779
        %v781 = vmul.f32 %v760, %v780
        %vm782 = vcmp.eq.f32.partialorder %v760, inf
        %v783 = vsel %vm782, %v760, %v781
        %vm784 = vcmp.eq.f32.partialorder %v760, 0.0
        %v785 = vand.u32 %v760, 2147483648
        %v786 = vsel %vm784, %v785, %v783
        %v787 = vadd.f32 %v774, 1e-08
        %v788 = vadd.f32 %v786, 1e-08
        %v789 = vrcp.pop %v787
        %v790 = vmul.f32 %v787, %v789
        %v791 = vsub.f32 1.0, %v790
        %v792 = vmul.f32 %v789, %v791
        %v793 = vadd.f32 %v789, %v792
        %vm794 = vweird.f32 %v787
        %vm795 = vweird.f32 %v789
        %vm796 = vmor %vm794, %vm795
        %v797 = vsel %vm796, %v789, %v793
        %v798 = vand.u32 2147483647, %v787
        %vm799 = vcmp.eq.f32.partialorder %v798, 8.507059e+37
        %v800 = vand.u32 %v787, 2147483648
        %v801 = vor.u32 1.1754944e-38, %v800
        %v802 = vsel %vm799, %v801, %v797
        %v803 = vmul.f32 1.0, %v802
        %v804 = vrcp.pop %v788
        %v805 = vmul.f32 %v788, %v804
        %v806 = vsub.f32 1.0, %v805
        %v807 = vmul.f32 %v804, %v806
        %v808 = vadd.f32 %v804, %v807
        %vm809 = vweird.f32 %v788
        %vm810 = vweird.f32 %v804
        %vm811 = vmor %vm809, %vm810
        %v812 = vsel %vm811, %v804, %v808
        %v813 = vand.u32 2147483647, %v788
        %vm814 = vcmp.eq.f32.partialorder %v813, 8.507059e+37
        %v815 = vand.u32 %v788, 2147483648
        %v816 = vor.u32 1.1754944e-38, %v815
        %v817 = vsel %vm814, %v816, %v812
        %v818 = vmul.f32 1.0, %v817
        %vm819 = vcmp.eq.s32.totalorder %v729, %v744
        %vm820 = vcmp.eq.s32.totalorder %v730, %v758
        %v821 = vsel %vm819, %v803, %v725
        %v822 = vsel %vm820, %v818, %v726
        %v823 = vadd.f32 %v727, %v803
        %v824 = vadd.f32 %v728, %v818
        %v825 = vsel %vm819, 2147483647, %v729
        %v826 = vsel %vm820, 2147483647, %v730
        %v827 = vand.u32 %v825, 65535
        %v828 = vshra.s32 %v825, 16
        %v829 = vcvt.s32.f32 %v827
        %v830 = vcvt.s32.f32 %v828
        %831 = vmin.xlane.f32.xlu0 %v830
        %v832 = vpop.xlane.xlu0 %831
        %vm833 = vcmp.eq.f32.partialorder %v830, %v832
        %v834 = vsel %vm833, %v829, inf
        %835 = vmin.xlane.f32.xlu0 %v834
        %v836 = vpop.xlane.xlu0 %835
        %v837 = vcvt.f32.s32 %v836
        %v838 = vcvt.f32.s32 %v832
        %v839 = vshll.u32 %v838, 16
        %v840 = vadd.s32 %v839, %v837
        %v841 = vand.u32 %v826, 65535
        %v842 = vshra.s32 %v826, 16
        %v843 = vcvt.s32.f32 %v841
        %v844 = vcvt.s32.f32 %v842
        %845 = vmin.xlane.f32.xlu0 %v844
        %v846 = vpop.xlane.xlu0 %845
        %vm847 = vcmp.eq.f32.partialorder %v844, %v846
        %v848 = vsel %vm847, %v843, inf
        %849 = vmin.xlane.f32.xlu0 %v848
        %v850 = vpop.xlane.xlu0 %849
        %v851 = vcvt.f32.s32 %v850
        %v852 = vcvt.f32.s32 %v846
        %v853 = vshll.u32 %v852, 16
        %v854 = vadd.s32 %v853, %v851
        %v855 = vand.u32 %v840, 4294967168
        %v856 = vand.u32 %v854, 4294967168
        %v859 = vrsqrt.pop %v855
        %v860 = vmul.f32 %v859, %v855
        %v861 = vmul.f32 %v860, %v859
        %v862 = vmul.f32 0.5, %v861
        %v863 = vsub.f32 1.5, %v862
        %v864 = vmul.f32 %v859, %v863
        %v865 = vmul.f32 %v855, %v864
        %vm866 = vcmp.eq.f32.partialorder %v855, inf
        %v867 = vsel %vm866, %v855, %v865
        %vm868 = vcmp.eq.f32.partialorder %v855, 0.0
        %v869 = vand.u32 %v855, 2147483648
        %v870 = vsel %vm868, %v869, %v867
        %v871 = vrsqrt.pop %v856
        %v872 = vmul.f32 %v871, %v856
        %v873 = vmul.f32 %v872, %v871
        %v874 = vmul.f32 0.5, %v873
        %v875 = vsub.f32 1.5, %v874
        %v876 = vmul.f32 %v871, %v875
        %v877 = vmul.f32 %v856, %v876
        %vm878 = vcmp.eq.f32.partialorder %v856, inf
        %v879 = vsel %vm878, %v856, %v877
        %vm880 = vcmp.eq.f32.partialorder %v856, 0.0
        %v881 = vand.u32 %v856, 2147483648
        %v882 = vsel %vm880, %v881, %v879
        %v883 = vadd.f32 %v870, 1e-08
        %v884 = vadd.f32 %v882, 1e-08
        %v885 = vrcp.pop %v883
        %v886 = vmul.f32 %v883, %v885
        %v887 = vsub.f32 1.0, %v886
        %v888 = vmul.f32 %v885, %v887
        %v889 = vadd.f32 %v885, %v888
        %vm890 = vweird.f32 %v883
        %vm891 = vweird.f32 %v885
        %vm892 = vmor %vm890, %vm891
        %v893 = vsel %vm892, %v885, %v889
        %v894 = vand.u32 2147483647, %v883
        %vm895 = vcmp.eq.f32.partialorder %v894, 8.507059e+37
        %v896 = vand.u32 %v883, 2147483648
        %v897 = vor.u32 1.1754944e-38, %v896
        %v898 = vsel %vm895, %v897, %v893
        %v899 = vmul.f32 1.0, %v898
        %v900 = vrcp.pop %v884
        %v901 = vmul.f32 %v884, %v900
        %v902 = vsub.f32 1.0, %v901
        %v903 = vmul.f32 %v900, %v902
        %v904 = vadd.f32 %v900, %v903
        %vm905 = vweird.f32 %v884
        %vm906 = vweird.f32 %v900
        %vm907 = vmor %vm905, %vm906
        %v908 = vsel %vm907, %v900, %v904
        %v909 = vand.u32 2147483647, %v884
        %vm910 = vcmp.eq.f32.partialorder %v909, 8.507059e+37
        %v911 = vand.u32 %v884, 2147483648
        %v912 = vor.u32 1.1754944e-38, %v911
        %v913 = vsel %vm910, %v912, %v908
        %v914 = vmul.f32 1.0, %v913
        %vm915 = vcmp.eq.s32.totalorder %v825, %v840
        %vm916 = vcmp.eq.s32.totalorder %v826, %v854
        %v917 = vsel %vm915, %v899, %v821
        %v918 = vsel %vm916, %v914, %v822
        %v919 = vadd.f32 %v823, %v899
        %v920 = vadd.f32 %v824, %v914
        %v921 = vrcp.pop %v919
        %v922 = vmul.f32 %v919, %v921
        %v923 = vsub.f32 1.0, %v922
        %v924 = vmul.f32 %v921, %v923
        %v925 = vadd.f32 %v921, %v924
        %vm926 = vweird.f32 %v919
        %vm927 = vweird.f32 %v921
        %vm928 = vmor %vm926, %vm927
        %v929 = vsel %vm928, %v921, %v925
        %v930 = vand.u32 2147483647, %v919
        %vm931 = vcmp.eq.f32.partialorder %v930, 8.507059e+37
        %v932 = vand.u32 %v919, 2147483648
        %v933 = vor.u32 1.1754944e-38, %v932
        %v934 = vsel %vm931, %v933, %v929
        %v935 = vmul.f32 1.0, %v934
        %v936 = vrcp.pop %v920
        %v937 = vmul.f32 %v920, %v936
        %v938 = vsub.f32 1.0, %v937
        %v939 = vmul.f32 %v936, %v938
        %v940 = vadd.f32 %v936, %v939
        %vm941 = vweird.f32 %v920
        %vm942 = vweird.f32 %v936
        %vm943 = vmor %vm941, %vm942
        %v944 = vsel %vm943, %v936, %v940
        %v945 = vand.u32 2147483647, %v920
        %vm946 = vcmp.eq.f32.partialorder %v945, 8.507059e+37
        %v947 = vand.u32 %v920, 2147483648
        %v948 = vor.u32 1.1754944e-38, %v947
        %v949 = vsel %vm946, %v948, %v944
        %v950 = vmul.f32 1.0, %v949
        %951 = vmatpush.msra.mxu0 %v581
        %952 = vmatpush.msra.mxu0 %v580
        %953 = vmatpush.msra.mxu0 %v579
        %954 = vmatpush.msra.mxu0 %v578
        %955 = vmatpush.msra.mxu0 %v577
        %956 = vmatpush.msra.mxu0 %v576
        %957 = vmatpush.msra.mxu0 %v575
        %958 = vmatpush.msra.mxu0 %v574
        %959 = vmatpush.msra.mxu0 %v573
        %960 = vmatpush.msra.mxu0 %v572
        %961 = vmatpush.msra.mxu0 %v571
        %962 = vmatpush.msra.mxu0 %v570
        %963 = vmatpush.msra.mxu0 %v569
        %964 = vmatpush.msra.mxu0 %v568
        %965 = vmatpush.msra.mxu0 %v567
        %966 = vmatpush.msra.mxu0 %v566
        %967 = vmatmul.f32.gmra.mxu0 %v917
        %v968 = vpop.f32.mrf.mxu0
        %v969 = vadd.f32 0.0, %v968
        %970 = vmatmul.f32.gmra.mxu0 %v918
        %v971 = vpop.f32.mrf.mxu0
        %v972 = vadd.f32 0.0, %v971
        %973 = vdwg.mxu0
        %v974 = vmul.f32 %v969, %v935
        %v975 = vmul.f32 %v972, %v950
        %v976 = vld [vmem:[#allocation5] sm:$0xff]
        %v977 = vld [vmem:[#allocation5 + $0x8] sm:$0xff]
        %v978 = vld [vmem:[#allocation5 + $0x10] sm:$0xff]
        %v979 = vld [vmem:[#allocation5 + $0x18] sm:$0xff]
        %v980 = vld [vmem:[#allocation5 + $0x20] sm:$0xff]
        %v981 = vld [vmem:[#allocation5 + $0x28] sm:$0xff]
        %v982 = vld [vmem:[#allocation5 + $0x30] sm:$0xff]
        %v983 = vld [vmem:[#allocation5 + $0x38] sm:$0xff]
        %v984 = vld [vmem:[#allocation5 + $0x40] sm:$0xff]
        %v985 = vld [vmem:[#allocation5 + $0x48] sm:$0xff]
        %v986 = vld [vmem:[#allocation5 + $0x50] sm:$0xff]
        %v987 = vld [vmem:[#allocation5 + $0x58] sm:$0xff]
        %v988 = vld [vmem:[#allocation5 + $0x60] sm:$0xff]
        %v989 = vld [vmem:[#allocation5 + $0x68] sm:$0xff]
        %v990 = vld [vmem:[#allocation5 + $0x70] sm:$0xff]
        %v991 = vld [vmem:[#allocation5 + $0x78] sm:$0xff]
        %v992 = vld [vmem:[#allocation7] sm:$0xff]
        %v993 = vld [vmem:[#allocation7 + $0x8] sm:$0xff]
        %v994 = vld [vmem:[#allocation7 + $0x10] sm:$0xff]
        %v995 = vld [vmem:[#allocation7 + $0x18] sm:$0xff]
        %v996 = vld [vmem:[#allocation7 + $0x20] sm:$0xff]
        %v997 = vld [vmem:[#allocation7 + $0x28] sm:$0xff]
        %v998 = vld [vmem:[#allocation7 + $0x30] sm:$0xff]
        %v999 = vld [vmem:[#allocation7 + $0x38] sm:$0xff]
        %v1000 = vld [vmem:[#allocation7 + $0x40] sm:$0xff]
        %v1001 = vld [vmem:[#allocation7 + $0x48] sm:$0xff]
        %v1002 = vld [vmem:[#allocation7 + $0x50] sm:$0xff]
        %v1003 = vld [vmem:[#allocation7 + $0x58] sm:$0xff]
        %v1004 = vld [vmem:[#allocation7 + $0x60] sm:$0xff]
        %v1005 = vld [vmem:[#allocation7 + $0x68] sm:$0xff]
        %v1006 = vld [vmem:[#allocation7 + $0x70] sm:$0xff]
        %v1007 = vld [vmem:[#allocation7 + $0x78] sm:$0xff]
        %1008 = vmatpush.msra.mxu0 %v1007
        %1009 = vmatpush.msra.mxu0 %v1006
        %1010 = vmatpush.msra.mxu0 %v1005
        %1011 = vmatpush.msra.mxu0 %v1004
        %1012 = vmatpush.msra.mxu0 %v1003
        %1013 = vmatpush.msra.mxu0 %v1002
        %1014 = vmatpush.msra.mxu0 %v1001
        %1015 = vmatpush.msra.mxu0 %v1000
        %1016 = vmatpush.msra.mxu0 %v999
        %1017 = vmatpush.msra.mxu0 %v998
        %1018 = vmatpush.msra.mxu0 %v997
        %1019 = vmatpush.msra.mxu0 %v996
        %1020 = vmatpush.msra.mxu0 %v995
        %1021 = vmatpush.msra.mxu0 %v994
        %1022 = vmatpush.msra.mxu0 %v993
        %1023 = vmatpush.msra.mxu0 %v992
        %1024 = vmatmul.f32.gmra.mxu0 %v564
        %v1025 = vpop.f32.mrf.mxu0
        %v1026 = vadd.f32 0.0, %v1025
        %1027 = vmatmul.f32.gmra.mxu0 %v565
        %v1028 = vpop.f32.mrf.mxu0
        %v1029 = vadd.f32 0.0, %v1028
        %1030 = vdwg.mxu0
        %1031 = vmatpush.msra.mxu0 %v991
        %1032 = vmatpush.msra.mxu0 %v990
        %1033 = vmatpush.msra.mxu0 %v989
        %1034 = vmatpush.msra.mxu0 %v988
        %1035 = vmatpush.msra.mxu0 %v987
        %1036 = vmatpush.msra.mxu0 %v986
        %1037 = vmatpush.msra.mxu0 %v985
        %1038 = vmatpush.msra.mxu0 %v984
        %1039 = vmatpush.msra.mxu0 %v983
        %1040 = vmatpush.msra.mxu0 %v982
        %1041 = vmatpush.msra.mxu0 %v981
        %1042 = vmatpush.msra.mxu0 %v980
        %1043 = vmatpush.msra.mxu0 %v979
        %1044 = vmatpush.msra.mxu0 %v978
        %1045 = vmatpush.msra.mxu0 %v977
        %1046 = vmatpush.msra.mxu0 %v976
        %1047 = vmatmul.f32.gmra.mxu0 %v974
        %v1048 = vpop.f32.mrf.mxu0
        %v1049 = vadd.f32 %v1026, %v1048
        %1050 = vmatmul.f32.gmra.mxu0 %v975
        %v1051 = vpop.f32.mrf.mxu0
        %v1052 = vadd.f32 %v1029, %v1051
        %1053 = vdwg.mxu0
        %v1054 = vld [vmem:[%s6] sm:$0x1]
        %v1056 = vperm.slane %v1054, 0
        %v1058 = vmul.f32 %v1049, %v1056
        %v1059 = vmul.f32 %v1052, %v1056
        %v1060 = vld [vmem:[%s7] sm:$0x1]
        %v1062 = vperm.slane %v1060, 0
        %v1064 = vadd.f32 %v1058, %v1062
        %v1065 = vadd.f32 %v1059, %v1062
        %v1066 = vmax.f32 %v1064, 0.0
        %v1067 = vmax.f32 %v1065, 0.0
        %v1068 = vld [vmem:[#allocation8] sm:$0xff]
        %v1069 = vld [vmem:[#allocation8 + $0x8] sm:$0xff]
        %v1070 = vld [vmem:[#allocation8 + $0x10] sm:$0xff]
        %v1071 = vld [vmem:[#allocation8 + $0x18] sm:$0xff]
        %v1072 = vld [vmem:[#allocation8 + $0x20] sm:$0xff]
        %v1073 = vld [vmem:[#allocation8 + $0x28] sm:$0xff]
        %v1074 = vld [vmem:[#allocation8 + $0x30] sm:$0xff]
        %v1075 = vld [vmem:[#allocation8 + $0x38] sm:$0xff]
        %v1076 = vld [vmem:[#allocation8 + $0x40] sm:$0xff]
        %v1077 = vld [vmem:[#allocation8 + $0x48] sm:$0xff]
        %v1078 = vld [vmem:[#allocation8 + $0x50] sm:$0xff]
        %v1079 = vld [vmem:[#allocation8 + $0x58] sm:$0xff]
        %v1080 = vld [vmem:[#allocation8 + $0x60] sm:$0xff]
        %v1081 = vld [vmem:[#allocation8 + $0x68] sm:$0xff]
        %v1082 = vld [vmem:[#allocation8 + $0x70] sm:$0xff]
        %v1083 = vld [vmem:[#allocation8 + $0x78] sm:$0xff]
        %1084 = vmatpush.msra.mxu0 %v1083
        %1085 = vmatpush.msra.mxu0 %v1082
        %1086 = vmatpush.msra.mxu0 %v1081
        %1087 = vmatpush.msra.mxu0 %v1080
        %1088 = vmatpush.msra.mxu0 %v1079
        %1089 = vmatpush.msra.mxu0 %v1078
        %1090 = vmatpush.msra.mxu0 %v1077
        %1091 = vmatpush.msra.mxu0 %v1076
        %1092 = vmatpush.msra.mxu0 %v1075
        %1093 = vmatpush.msra.mxu0 %v1074
        %1094 = vmatpush.msra.mxu0 %v1073
        %1095 = vmatpush.msra.mxu0 %v1072
        %1096 = vmatpush.msra.mxu0 %v1071
        %1097 = vmatpush.msra.mxu0 %v1070
        %1098 = vmatpush.msra.mxu0 %v1069
        %1099 = vmatpush.msra.mxu0 %v1068
        %1100 = vmatmul.f32.gmra.mxu0 %v1066
        %v1101 = vpop.f32.mrf.mxu0
        %v1102 = vadd.f32 0.0, %v1101
        %1103 = vmatmul.f32.gmra.mxu0 %v1067
        %v1104 = vpop.f32.mrf.mxu0
        %v1105 = vadd.f32 0.0, %v1104
        %1106 = vdwg.mxu0
        %v1107 = vld [vmem:[%s9] sm:$0x1]
        %v1109 = vperm.slane %v1107, 0
        %v1111 = vmul.f32 %v1102, %v1109
        %v1112 = vmul.f32 %v1105, %v1109
        %v1113 = vld [vmem:[%s10] sm:$0x1]
        %v1115 = vperm.slane %v1113, 0
        %v1117 = vadd.f32 %v1111, %v1115
        %v1118 = vadd.f32 %v1112, %v1115
        %v1119 = vmax.f32 %v1117, 0.0
        %v1120 = vmax.f32 %v1118, 0.0
        %1121 = vst [vmem:[%s535] sm:$0xff] %v1119
        %1122 = vst [vmem:[%s535 + $0x8] sm:$0xff] %v1120
        %s1123 = sand.u32 %s307, 1
        %s1124 = scalar_lea.sflag [#allocation4], %s1123
        %s1125 = sand.u32 %s307, 1
        %s1126 = smul.addr %s1125, 16
        %s1127 = scalar_lea.vmem [#allocation10], %s1126
        // Predicated region
        $region81: #{tpu_custom_call.1} parent=63 // pred_check
          %p1128 = pneg %p317
        $region82: #{tpu_custom_call.1} parent=63 // pred_check_branch
          %1130 = sbr.rel (%p1128) target = $region84
        $region83: #{tpu_custom_call.1} parent=63 // pred_region
          %s1131 = smul.u32 2, %s35
          %1133 = vsyncadd %s1124, 0
          %s1134 = smul.addr %s34, 2
          %s1135 = sadd.s32 %s1131, %s1134
          %s1136 = smul.addr %s1135, 8
          %s1137 = scalar_lea.hbm %s11, %s1136
          %s1138 = sshll.u32 %s1127, 4
          %s1139 = int_to_ptr.vmem [resolvable:$true] %s1138
          %s1140 = sshll.u32 %s1137, 4
          %s1141 = int_to_ptr.hbm [resolvable:$true] %s1140
          %1146 = dma.vmem_to_hbm [thread:$0]  %s1139, 256, %s1141, %s1124, 128, 128, 8
        $region84: #{tpu_custom_call.1} parent=63 // pred_fallthru
          _
      $region64: #{tpu_custom_call.1} parent=5 // pred_fallthru
        _
      %p1147 = scmp.le.s32.totalorder 2, %s25
      // Predicated region
      $region85: #{tpu_custom_call.1} parent=5 // pred_check
        %p1148 = pneg %p1147
      $region86: #{tpu_custom_call.1} parent=5 // pred_check_branch
        %1150 = sbr.rel (%p1148) target = $region88
      $region87: #{tpu_custom_call.1} parent=5 // pred_region
        %s1151 = ssub.s32 %s25, 2
        // Predicated region
        $region89: #{tpu_custom_call.1} parent=87 // pred_check
          %p1152 = pneg %p323
        $region90: #{tpu_custom_call.1} parent=87 // pred_check_branch
          %1154 = sbr.rel (%p1152) target = $region92
        $region91: #{tpu_custom_call.1} parent=87 // pred_region
          %s1155 = sand.u32 %s308, 1
          %s1156 = scalar_lea.sflag [#allocation4], %s1155
          %s1157 = sand.u32 %s308, 1
          %s1158 = smul.addr %s1157, 16
          %s1159 = scalar_lea.vmem [#allocation10], %s1158
          %1161 = dma.done %s1156, 256
        $region92: #{tpu_custom_call.1} parent=87 // pred_fallthru
          _
      $region88: #{tpu_custom_call.1} parent=5 // pred_fallthru
        _
    $region6: #{tpu_custom_call.1} parent=1 // loop_footer
      %s29 = sadd.s32 1, %s25
    $region7: #{tpu_custom_call.1} parent=1 // loop_footer_branch
      %24 = sbr.rel target = $region3
    $region8: #{tpu_custom_call.1} parent=1 // loop_exit
      _
    %1162 = vsyncpa [#allocation3], 1
    %s1163 = scalar_lea.sflag [#allocation3], 1
    %1164 = vsyncpa %s1163, 1
    %1165 = vsyncpa [#allocation6], 1
    %1166 = vsyncpa [#allocation9], 1
    %1167 = vsyncpa [#allocation4], 1
    %s1168 = scalar_lea.sflag [#allocation4], 1
    %1169 = vsyncpa %s1168, 1

</llo_original>
